<compile_context>
chip_gen: v6e
topology: v6e:2x2x1
jax: 0.10.0
libtpu: 0.0.40
codegen_flags: <defaults>
</compile_context>

<pallas_src>
import numpy as np
import jax
import jax.numpy as jnp
from jax.experimental import pallas as pl
from jax.experimental.pallas import tpu as pltpu

# ----------------------------- configuration --------------------------------
INPUT_DIM = 9          # data.x feature dim (module default input_dim=9)
HIDDEN = 128           # hidden_dim
NUM_CLASSES = 2        # classifier = nn.Linear(128, 2)
LEAKY_SLOPE = 0.2      # PyG GATConv default negative_slope
NEG_INF = -1e30

NUM_BATCHES = 4        # independent trajectory batches per pallas_call (grid axis)
NUM_GRAPHS = 2         # graphs per trajectory batch
NODES_PER_GRAPH = 60
N_NODES = NUM_GRAPHS * NODES_PER_GRAPH
N_PAD = 128            # node count padded to lane width (128)
G_PAD = 8              # graph count padded to a sublane multiple

# rows of the packed (8,128) vector operand
ROW_B1, ROW_A1S, ROW_A1D, ROW_B2, ROW_A2S, ROW_A2D, ROW_BC = range(7)


# -------------------- Pallas kernel: fused TrajectoryGAT --------------------
def _trajectory_gat_kernel(x_ref, bias_s_ref, bias_t_ref, pool_ref,
                           w1_ref, w2_ref, wc_ref, vec_ref, o_ref):

    def vec_row(i):
        return vec_ref[i:i + 1, :]                       # (1, HIDDEN) f32, static slice

    def gat_layer(x_bf, bias_ref, w_ref, b, a_src, a_dst):
        # h = x @ W  (bf16 operands, f32 accumulation).  Attention scores in f32.
        h = jnp.dot(x_bf, w_ref[...], preferred_element_type=jnp.float32)   # (N, D)

        # e_dst[i] = <h_i, a_dst>: VPU multiply + lane reduce — off the MXU path.
        e_dst = jnp.sum(h * a_dst, axis=-1, keepdims=True)                  # (N, 1)
        # e_src as a (1, N) row directly (contraction over features, no transpose).
        e_src = jax.lax.dot_general(a_src, h, (((1,), (1,)), ((), ())),
                                    preferred_element_type=jnp.float32)     # (1, N)

        s = e_dst + e_src                                                    # (N, N)
        s = jnp.where(s > 0.0, s, LEAKY_SLOPE * s)                           # LeakyReLU(0.2)
        s = s + bias_ref[...]                                                # 0 / -1e30 mask
        s = s - jnp.max(s, axis=-1, keepdims=True)
        p = jnp.exp(s)
        p = p / jnp.sum(p, axis=-1, keepdims=True)                           # exact softmax

        # out[i] = sum_j alpha[i, j] * h[j]  + bias
        return jnp.dot(p.astype(jnp.bfloat16), h.astype(jnp.bfloat16),
                       preferred_element_type=jnp.float32) + b

    # TODO(synk): layer_norm1/2, fc, fc_adjust, time_embedding exist in the
    # PyTorch module but are unused by forward(); not implemented here.
    h1 = jnp.maximum(
        gat_layer(x_ref[...], bias_s_ref, w1_ref,
                  vec_row(ROW_B1), vec_row(ROW_A1S), vec_row(ROW_A1D)), 0.0)
    h2 = gat_layer(h1.astype(jnp.bfloat16), bias_t_ref, w2_ref,
                   vec_row(ROW_B2), vec_row(ROW_A2S), vec_row(ROW_A2D))

    # global_mean_pool: pool rows already hold 1/|graph| weights (precomputed).
    pooled = jnp.dot(pool_ref[...], h2, preferred_element_type=jnp.float32)  # (G_PAD, D)

    # classifier Linear(128, 2) zero-padded to 128 output lanes (lane-dense store)
    logits = jnp.dot(pooled.astype(jnp.bfloat16), wc_ref[...],
                     preferred_element_type=jnp.float32) + vec_row(ROW_BC)

    # log_softmax over the first NUM_CLASSES lanes; padded lanes written as 0.
    lane = jax.lax.broadcasted_iota(jnp.int32, logits.shape, 1)
    masked = jnp.where(lane < NUM_CLASSES, logits, NEG_INF)
    z = masked - jnp.max(masked, axis=-1, keepdims=True)
    lse = jnp.log(jnp.sum(jnp.exp(z), axis=-1, keepdims=True))
    o_ref[...] = jnp.where(lane < NUM_CLASSES, z - lse, 0.0)


def trajectory_gat_forward(params, x, bias_s, bias_t, pool):
    n_b = x.shape[0]

    def batched(shape):      # per-batch block, leading grid dim squeezed out
        return pl.BlockSpec((None,) + shape, lambda b: (b,) + (0,) * len(shape))

    def resident(shape):     # constant block index -> DMA'd once, stays in VMEM
        return pl.BlockSpec(shape, lambda b: (0,) * len(shape))

    out_pad = pl.pallas_call(
        _trajectory_gat_kernel,
        grid=(n_b,),
        in_specs=[batched((N_PAD, HIDDEN)),        # x (bf16)
                  batched((N_PAD, N_PAD)),         # spatial additive mask (bf16)
                  batched((N_PAD, N_PAD)),         # temporal additive mask (bf16)
                  batched((G_PAD, N_PAD)),         # mean-pool matrix (f32)
                  resident((HIDDEN, HIDDEN)),      # w1 (bf16)
                  resident((HIDDEN, HIDDEN)),      # w2 (bf16)
                  resident((HIDDEN, HIDDEN)),      # w_cls (bf16)
                  resident((8, HIDDEN))],          # packed biases / attention vecs (f32)
        out_specs=batched((G_PAD, HIDDEN)),
        out_shape=jax.ShapeDtypeStruct((n_b, G_PAD, HIDDEN), jnp.float32),
        compiler_params=pltpu.CompilerParams(dimension_semantics=("parallel",)),
    )(x, bias_s, bias_t, pool,
      params['w1'], params['w2'], params['w_cls'], params['vecs'])
    return out_pad[:, :NUM_GRAPHS, :NUM_CLASSES]                 # (B, G, 2)


# ------------------------- host-side (plain JAX) glue ------------------------
def dense_bias(edge_index, n_pad):
    # TODO(synk): edge_index -> dense mask is an irregular scatter; done in plain
    # JAX as static preprocessing, not inside a Pallas kernel.
    src, dst = edge_index[0], edge_index[1]
    adj = jnp.zeros((n_pad, n_pad), jnp.float32).at[dst, src].set(1.0)
    # GATConv(add_self_loops=True): every node (incl. padding rows) gets a
    # self-loop so no softmax row is fully masked.
    adj = jnp.maximum(adj, jnp.eye(n_pad, dtype=jnp.float32))
    return jnp.where(adj > 0.0, 0.0, NEG_INF).astype(jnp.bfloat16)


def mean_pool_matrix(batch, num_graphs, g_pad, n_pad):
    n = batch.shape[0]
    onehot = (batch[None, :] == jnp.arange(num_graphs)[:, None]).astype(jnp.float32)
    counts = jnp.maximum(onehot.sum(axis=1, keepdims=True), 1.0)
    m = onehot / counts                                  # rows sum to 1 => mean pool
    return jnp.pad(m, ((0, g_pad - num_graphs), (0, n_pad - n)))


# ------------------------------- parameters ----------------------------------
def init_params(key):
    ks = jax.random.split(key, 8)

    def xavier(k, shape):
        limit = float(np.sqrt(6.0 / (shape[0] + shape[1])))
        return jax.random.uniform(k, shape, jnp.float32, -limit, limit)

    # all linear weights stored pre-transposed (in_features, out_features),
    # zero-padded to lane-aligned shapes, and pre-cast to bf16 on the host.
    w1 = jnp.zeros((HIDDEN, HIDDEN), jnp.float32).at[:INPUT_DIM, :].set(
        xavier(ks[0], (INPUT_DIM, HIDDEN)))
    w_cls = jnp.zeros((HIDDEN, HIDDEN), jnp.float32).at[:, :NUM_CLASSES].set(
        xavier(ks[5], (HIDDEN, NUM_CLASSES)))

    # packed (8,128) vector operand: biases stay zero (PyTorch zero-init biases)
    vecs = jnp.zeros((8, HIDDEN), jnp.float32)
    vecs = vecs.at[ROW_A1S].set(0.1 * jax.random.normal(ks[1], (HIDDEN,)))
    vecs = vecs.at[ROW_A1D].set(0.1 * jax.random.normal(ks[2], (HIDDEN,)))
    vecs = vecs.at[ROW_A2S].set(0.1 * jax.random.normal(ks[4], (HIDDEN,)))
    vecs = vecs.at[ROW_A2D].set(0.1 * jax.random.normal(ks[6], (HIDDEN,)))

    return {
        'w1': w1.astype(jnp.bfloat16),                                  # GATConv(9,128)
        'w2': xavier(ks[3], (HIDDEN, HIDDEN)).astype(jnp.bfloat16),     # GATConv(128,128)
        'w_cls': w_cls.astype(jnp.bfloat16),                            # Linear(128,2)
        'vecs': vecs,
    }


# ---------------------------------- main --------------------------------------
if __name__ == "__main__":
    key = jax.random.PRNGKey(0)
    pkey, xkey = jax.random.split(key, 2)
    params = init_params(pkey)

    # deterministic synthetic data: NUM_BATCHES batches of 2 graphs x 60 nodes
    batch = jnp.repeat(jnp.arange(NUM_GRAPHS, dtype=jnp.int32), NODES_PER_GRAPH)

    # spatial edges: bidirectional chain inside each graph
    src, dst = [], []
    for g in range(NUM_GRAPHS):
        base = g * NODES_PER_GRAPH
        for i in range(NODES_PER_GRAPH - 1):
            src += [base + i, base + i + 1]
            dst += [base + i + 1, base + i]
    edge_index_spatial = jnp.array([src, dst], dtype=jnp.int32)

    # temporal edges: bidirectional skip links (stride 5) inside each graph
    src, dst = [], []
    for g in range(NUM_GRAPHS):
        base = g * NODES_PER_GRAPH
        for i in range(NODES_PER_GRAPH - 5):
            src += [base + i, base + i + 5]
            dst += [base + i + 5, base + i]
    edge_index_temporal = jnp.array([src, dst], dtype=jnp.int32)

    # TODO(synk): spatial/temporal edge weights are unused — PyG GATConv with
    # edge_dim=None ignores edge_attr, so they are not passed to the kernel.

    x = jax.random.normal(xkey, (NUM_BATCHES, N_NODES, INPUT_DIM), jnp.float32)
    x_pad = jnp.zeros((NUM_BATCHES, N_PAD, HIDDEN), jnp.float32)
    x_pad = x_pad.at[:, :N_NODES, :INPUT_DIM].set(x).astype(jnp.bfloat16)

    bias_s = jnp.broadcast_to(dense_bias(edge_index_spatial, N_PAD),
                              (NUM_BATCHES, N_PAD, N_PAD))
    bias_t = jnp.broadcast_to(dense_bias(edge_index_temporal, N_PAD),
                              (NUM_BATCHES, N_PAD, N_PAD))
    pool = jnp.broadcast_to(mean_pool_matrix(batch, NUM_GRAPHS, G_PAD, N_PAD),
                            (NUM_BATCHES, G_PAD, N_PAD))

    log_probs = jax.jit(trajectory_gat_forward)(params, x_pad, bias_s, bias_t, pool)
    log_probs = jax.block_until_ready(log_probs)

    assert log_probs.shape == (NUM_BATCHES, NUM_GRAPHS, NUM_CLASSES)
    assert log_probs.dtype == jnp.float32
    assert bool(jnp.all(jnp.isfinite(log_probs)))
    assert bool(jnp.allclose(jnp.exp(log_probs).sum(axis=-1), 1.0, atol=1e-2))
    print("KERNEL_OK")
</pallas_src>

<mosaic_0001>
module attributes {stable_mosaic.version = 11 : i64} {
  func.func @_trajectory_gat_kernel(%arg0: i32, %arg1: memref<1x128x128xbf16, #tpu.memory_space<vmem>>, %arg2: memref<1x128x128xbf16, #tpu.memory_space<vmem>>, %arg3: memref<1x128x128xbf16, #tpu.memory_space<vmem>>, %arg4: memref<1x8x128xf32, #tpu.memory_space<vmem>>, %arg5: memref<128x128xbf16, #tpu.memory_space<vmem>>, %arg6: memref<128x128xbf16, #tpu.memory_space<vmem>>, %arg7: memref<128x128xbf16, #tpu.memory_space<vmem>>, %arg8: memref<8x128xf32, #tpu.memory_space<vmem>>, %arg9: memref<1x8x128xf32, #tpu.memory_space<vmem>>) attributes {dimension_semantics = [#tpu.dimension_semantics<parallel>], iteration_bounds = array<i64: 4>, scalar_prefetch = 0 : i64, scratch_operands = 0 : i64, tpu.core_type = #tpu.core_type<tc>, window_params = [{transform_indices = @transform_0, window_bounds = array<i64: 1, 128, 128>}, {transform_indices = @transform_1, window_bounds = array<i64: 1, 128, 128>}, {transform_indices = @transform_2, window_bounds = array<i64: 1, 128, 128>}, {transform_indices = @transform_3, window_bounds = array<i64: 1, 8, 128>}, {pipeline_mode = #tpu.pipeline_mode<synchronous>, transform_indices = @transform_4, window_bounds = array<i64: 128, 128>}, {pipeline_mode = #tpu.pipeline_mode<synchronous>, transform_indices = @transform_5, window_bounds = array<i64: 128, 128>}, {pipeline_mode = #tpu.pipeline_mode<synchronous>, transform_indices = @transform_6, window_bounds = array<i64: 128, 128>}, {pipeline_mode = #tpu.pipeline_mode<synchronous>, transform_indices = @transform_7, window_bounds = array<i64: 8, 128>}, {transform_indices = @transform_8, window_bounds = array<i64: 1, 8, 128>}]} {
    %c0 = arith.constant 0 : index
    %c0_0 = arith.constant 0 : index
    %c0_1 = arith.constant 0 : index
    %0 = vector.load %arg1[%c0, %c0_0, %c0_1] : memref<1x128x128xbf16, #tpu.memory_space<vmem>>, vector<1x128x128xbf16>
    %1 = vector.shape_cast %0 : vector<1x128x128xbf16> to vector<128x128xbf16>
    %c0_2 = arith.constant 0 : index
    %c0_3 = arith.constant 0 : index
    %2 = vector.load %arg8[%c0_2, %c0_3] : memref<8x128xf32, #tpu.memory_space<vmem>>, vector<1x128xf32>
    %c1 = arith.constant 1 : index
    %c0_4 = arith.constant 0 : index
    %3 = vector.load %arg8[%c1, %c0_4] : memref<8x128xf32, #tpu.memory_space<vmem>>, vector<1x128xf32>
    %c2 = arith.constant 2 : index
    %c0_5 = arith.constant 0 : index
    %4 = vector.load %arg8[%c2, %c0_5] : memref<8x128xf32, #tpu.memory_space<vmem>>, vector<1x128xf32>
    %c0_6 = arith.constant 0 : index
    %c0_7 = arith.constant 0 : index
    %5 = vector.load %arg5[%c0_6, %c0_7] : memref<128x128xbf16, #tpu.memory_space<vmem>>, vector<128x128xbf16>
    %cst = arith.constant dense<0.000000e+00> : vector<128x128xf32>
    %6 = tpu.matmul %1, %5, %cst {dimension_numbers = #tpu.dot_dimension_numbers<[1], [0], [0], [1], [0, 0, 1, 1], [], []>} : vector<128x128xbf16>, vector<128x128xbf16>, vector<128x128xf32> -> vector<128x128xf32>
    %7 = vector.broadcast %4 : vector<1x128xf32> to vector<128x128xf32>
    %8 = arith.mulf %6, %7 : vector<128x128xf32>
    %cst_8 = arith.constant dense<0.000000e+00> : vector<128xf32>
    %9 = vector.multi_reduction <add>, %8, %cst_8 [1] : vector<128x128xf32> to vector<128xf32>
    %10 = vector.shape_cast %9 : vector<128xf32> to vector<128x1xf32>
    %cst_9 = arith.constant dense<0.000000e+00> : vector<1x128xf32>
    %11 = tpu.matmul %3, %6, %cst_9 {dimension_numbers = #tpu.dot_dimension_numbers<[1], [1], [0], [0], [0, 0, 1, 0], [], []>} : vector<1x128xf32>, vector<128x128xf32>, vector<1x128xf32> -> vector<1x128xf32>
    %12 = vector.broadcast %10 : vector<128x1xf32> to vector<128x128xf32>
    %13 = vector.broadcast %11 : vector<1x128xf32> to vector<128x128xf32>
    %14 = arith.addf %12, %13 : vector<128x128xf32>
    %cst_10 = arith.constant 0.000000e+00 : f32
    %15 = vector.broadcast %cst_10 : f32 to vector<128x128xf32>
    %16 = arith.cmpf ogt, %14, %15 : vector<128x128xf32>
    %cst_11 = arith.constant 2.000000e-01 : f32
    %17 = vector.broadcast %cst_11 : f32 to vector<128x128xf32>
    %18 = arith.mulf %17, %14 : vector<128x128xf32>
    %19 = arith.select %16, %14, %18 : vector<128x128xi1>, vector<128x128xf32>
    %c0_12 = arith.constant 0 : index
    %c0_13 = arith.constant 0 : index
    %c0_14 = arith.constant 0 : index
    %20 = vector.load %arg2[%c0_12, %c0_13, %c0_14] : memref<1x128x128xbf16, #tpu.memory_space<vmem>>, vector<1x128x128xbf16>
    %21 = vector.shape_cast %20 : vector<1x128x128xbf16> to vector<128x128xbf16>
    %22 = arith.extf %21 : vector<128x128xbf16> to vector<128x128xf32>
    %23 = arith.addf %19, %22 : vector<128x128xf32>
    %cst_15 = arith.constant dense<0xFF800000> : vector<128xf32>
    %24 = vector.multi_reduction <maximumf>, %23, %cst_15 [1] : vector<128x128xf32> to vector<128xf32>
    %25 = vector.shape_cast %24 : vector<128xf32> to vector<128x1xf32>
    %26 = vector.broadcast %25 : vector<128x1xf32> to vector<128x128xf32>
    %27 = arith.subf %23, %26 : vector<128x128xf32>
    %28 = math.exp %27 : vector<128x128xf32>
    %cst_16 = arith.constant dense<0.000000e+00> : vector<128xf32>
    %29 = vector.multi_reduction <add>, %28, %cst_16 [1] : vector<128x128xf32> to vector<128xf32>
    %30 = vector.shape_cast %29 : vector<128xf32> to vector<128x1xf32>
    %31 = vector.broadcast %30 : vector<128x1xf32> to vector<128x128xf32>
    %32 = arith.divf %28, %31 : vector<128x128xf32>
    %33 = arith.truncf %32 : vector<128x128xf32> to vector<128x128xbf16>
    %34 = arith.truncf %6 : vector<128x128xf32> to vector<128x128xbf16>
    %cst_17 = arith.constant dense<0.000000e+00> : vector<128x128xf32>
    %35 = tpu.matmul %33, %34, %cst_17 {dimension_numbers = #tpu.dot_dimension_numbers<[1], [0], [0], [1], [0, 0, 1, 1], [], []>} : vector<128x128xbf16>, vector<128x128xbf16>, vector<128x128xf32> -> vector<128x128xf32>
    %36 = vector.broadcast %2 : vector<1x128xf32> to vector<128x128xf32>
    %37 = arith.addf %35, %36 : vector<128x128xf32>
    %cst_18 = arith.constant 0.000000e+00 : f32
    %38 = vector.broadcast %cst_18 : f32 to vector<128x128xf32>
    %39 = arith.maximumf %37, %38 : vector<128x128xf32>
    %40 = arith.truncf %39 : vector<128x128xf32> to vector<128x128xbf16>
    %c3 = arith.constant 3 : index
    %c0_19 = arith.constant 0 : index
    %41 = vector.load %arg8[%c3, %c0_19] : memref<8x128xf32, #tpu.memory_space<vmem>>, vector<1x128xf32>
    %c4 = arith.constant 4 : index
    %c0_20 = arith.constant 0 : index
    %42 = vector.load %arg8[%c4, %c0_20] : memref<8x128xf32, #tpu.memory_space<vmem>>, vector<1x128xf32>
    %c5 = arith.constant 5 : index
    %c0_21 = arith.constant 0 : index
    %43 = vector.load %arg8[%c5, %c0_21] : memref<8x128xf32, #tpu.memory_space<vmem>>, vector<1x128xf32>
    %c0_22 = arith.constant 0 : index
    %c0_23 = arith.constant 0 : index
    %44 = vector.load %arg6[%c0_22, %c0_23] : memref<128x128xbf16, #tpu.memory_space<vmem>>, vector<128x128xbf16>
    %cst_24 = arith.constant dense<0.000000e+00> : vector<128x128xf32>
    %45 = tpu.matmul %40, %44, %cst_24 {dimension_numbers = #tpu.dot_dimension_numbers<[1], [0], [0], [1], [0, 0, 1, 1], [], []>} : vector<128x128xbf16>, vector<128x128xbf16>, vector<128x128xf32> -> vector<128x128xf32>
    %46 = vector.broadcast %43 : vector<1x128xf32> to vector<128x128xf32>
    %47 = arith.mulf %45, %46 : vector<128x128xf32>
    %cst_25 = arith.constant dense<0.000000e+00> : vector<128xf32>
    %48 = vector.multi_reduction <add>, %47, %cst_25 [1] : vector<128x128xf32> to vector<128xf32>
    %49 = vector.shape_cast %48 : vector<128xf32> to vector<128x1xf32>
    %cst_26 = arith.constant dense<0.000000e+00> : vector<1x128xf32>
    %50 = tpu.matmul %42, %45, %cst_26 {dimension_numbers = #tpu.dot_dimension_numbers<[1], [1], [0], [0], [0, 0, 1, 0], [], []>} : vector<1x128xf32>, vector<128x128xf32>, vector<1x128xf32> -> vector<1x128xf32>
    %51 = vector.broadcast %49 : vector<128x1xf32> to vector<128x128xf32>
    %52 = vector.broadcast %50 : vector<1x128xf32> to vector<128x128xf32>
    %53 = arith.addf %51, %52 : vector<128x128xf32>
    %cst_27 = arith.constant 0.000000e+00 : f32
    %54 = vector.broadcast %cst_27 : f32 to vector<128x128xf32>
    %55 = arith.cmpf ogt, %53, %54 : vector<128x128xf32>
    %cst_28 = arith.constant 2.000000e-01 : f32
    %56 = vector.broadcast %cst_28 : f32 to vector<128x128xf32>
    %57 = arith.mulf %56, %53 : vector<128x128xf32>
    %58 = arith.select %55, %53, %57 : vector<128x128xi1>, vector<128x128xf32>
    %c0_29 = arith.constant 0 : index
    %c0_30 = arith.constant 0 : index
    %c0_31 = arith.constant 0 : index
    %59 = vector.load %arg3[%c0_29, %c0_30, %c0_31] : memref<1x128x128xbf16, #tpu.memory_space<vmem>>, vector<1x128x128xbf16>
    %60 = vector.shape_cast %59 : vector<1x128x128xbf16> to vector<128x128xbf16>
    %61 = arith.extf %60 : vector<128x128xbf16> to vector<128x128xf32>
    %62 = arith.addf %58, %61 : vector<128x128xf32>
    %cst_32 = arith.constant dense<0xFF800000> : vector<128xf32>
    %63 = vector.multi_reduction <maximumf>, %62, %cst_32 [1] : vector<128x128xf32> to vector<128xf32>
    %64 = vector.shape_cast %63 : vector<128xf32> to vector<128x1xf32>
    %65 = vector.broadcast %64 : vector<128x1xf32> to vector<128x128xf32>
    %66 = arith.subf %62, %65 : vector<128x128xf32>
    %67 = math.exp %66 : vector<128x128xf32>
    %cst_33 = arith.constant dense<0.000000e+00> : vector<128xf32>
    %68 = vector.multi_reduction <add>, %67, %cst_33 [1] : vector<128x128xf32> to vector<128xf32>
    %69 = vector.shape_cast %68 : vector<128xf32> to vector<128x1xf32>
    %70 = vector.broadcast %69 : vector<128x1xf32> to vector<128x128xf32>
    %71 = arith.divf %67, %70 : vector<128x128xf32>
    %72 = arith.truncf %71 : vector<128x128xf32> to vector<128x128xbf16>
    %73 = arith.truncf %45 : vector<128x128xf32> to vector<128x128xbf16>
    %cst_34 = arith.constant dense<0.000000e+00> : vector<128x128xf32>
    %74 = tpu.matmul %72, %73, %cst_34 {dimension_numbers = #tpu.dot_dimension_numbers<[1], [0], [0], [1], [0, 0, 1, 1], [], []>} : vector<128x128xbf16>, vector<128x128xbf16>, vector<128x128xf32> -> vector<128x128xf32>
    %75 = vector.broadcast %41 : vector<1x128xf32> to vector<128x128xf32>
    %76 = arith.addf %74, %75 : vector<128x128xf32>
    %c0_35 = arith.constant 0 : index
    %c0_36 = arith.constant 0 : index
    %c0_37 = arith.constant 0 : index
    %77 = vector.load %arg4[%c0_35, %c0_36, %c0_37] : memref<1x8x128xf32, #tpu.memory_space<vmem>>, vector<1x8x128xf32>
    %78 = vector.shape_cast %77 : vector<1x8x128xf32> to vector<8x128xf32>
    %cst_38 = arith.constant dense<0.000000e+00> : vector<8x128xf32>
    %79 = tpu.matmul %78, %76, %cst_38 {dimension_numbers = #tpu.dot_dimension_numbers<[1], [0], [0], [1], [0, 0, 1, 1], [], []>} : vector<8x128xf32>, vector<128x128xf32>, vector<8x128xf32> -> vector<8x128xf32>
    %80 = arith.truncf %79 : vector<8x128xf32> to vector<8x128xbf16>
    %c0_39 = arith.constant 0 : index
    %c0_40 = arith.constant 0 : index
    %81 = vector.load %arg7[%c0_39, %c0_40] : memref<128x128xbf16, #tpu.memory_space<vmem>>, vector<128x128xbf16>
    %cst_41 = arith.constant dense<0.000000e+00> : vector<8x128xf32>
    %82 = tpu.matmul %80, %81, %cst_41 {dimension_numbers = #tpu.dot_dimension_numbers<[1], [0], [0], [1], [0, 0, 1, 1], [], []>} : vector<8x128xbf16>, vector<128x128xbf16>, vector<8x128xf32> -> vector<8x128xf32>
    %c6 = arith.constant 6 : index
    %c0_42 = arith.constant 0 : index
    %83 = vector.load %arg8[%c6, %c0_42] : memref<8x128xf32, #tpu.memory_space<vmem>>, vector<1x128xf32>
    %84 = vector.broadcast %83 : vector<1x128xf32> to vector<8x128xf32>
    %85 = arith.addf %82, %84 : vector<8x128xf32>
    %86 = tpu.iota {dimensions = array<i32: 1>} : vector<8x128xi32>
    %c2_i32 = arith.constant 2 : i32
    %87 = vector.broadcast %c2_i32 : i32 to vector<8x128xi32>
    %88 = arith.cmpi slt, %86, %87 : vector<8x128xi32>
    %cst_43 = arith.constant -1.000000e+30 : f32
    %89 = vector.broadcast %cst_43 : f32 to vector<8x128xf32>
    %90 = arith.select %88, %85, %89 : vector<8x128xi1>, vector<8x128xf32>
    %cst_44 = arith.constant dense<0xFF800000> : vector<8xf32>
    %91 = vector.multi_reduction <maximumf>, %90, %cst_44 [1] : vector<8x128xf32> to vector<8xf32>
    %92 = vector.shape_cast %91 : vector<8xf32> to vector<8x1xf32>
    %93 = vector.broadcast %92 : vector<8x1xf32> to vector<8x128xf32>
    %94 = arith.subf %90, %93 : vector<8x128xf32>
    %95 = math.exp %94 : vector<8x128xf32>
    %cst_45 = arith.constant dense<0.000000e+00> : vector<8xf32>
    %96 = vector.multi_reduction <add>, %95, %cst_45 [1] : vector<8x128xf32> to vector<8xf32>
    %97 = vector.shape_cast %96 : vector<8xf32> to vector<8x1xf32>
    %98 = math.log %97 : vector<8x1xf32>
    %c2_i32_46 = arith.constant 2 : i32
    %99 = vector.broadcast %c2_i32_46 : i32 to vector<8x128xi32>
    %100 = arith.cmpi slt, %86, %99 : vector<8x128xi32>
    %101 = vector.broadcast %98 : vector<8x1xf32> to vector<8x128xf32>
    %102 = arith.subf %94, %101 : vector<8x128xf32>
    %cst_47 = arith.constant 0.000000e+00 : f32
    %103 = vector.broadcast %cst_47 : f32 to vector<8x128xf32>
    %104 = arith.select %100, %102, %103 : vector<8x128xi1>, vector<8x128xf32>
    %c0_48 = arith.constant 0 : index
    %c0_49 = arith.constant 0 : index
    %c0_50 = arith.constant 0 : index
    %105 = vector.load %arg9[%c0_48, %c0_49, %c0_50] : memref<1x8x128xf32, #tpu.memory_space<vmem>>, vector<1x8x128xf32>
    %106 = vector.shape_cast %105 : vector<1x8x128xf32> to vector<8x128xf32>
    %107 = vector.shape_cast %104 : vector<8x128xf32> to vector<1x8x128xf32>
    tpu.vector_store %arg9[%c0_48, %c0_49, %c0_50], %107 {strides = array<i32>} : memref<1x8x128xf32, #tpu.memory_space<vmem>>, vector<1x8x128xf32>,
    return
  }
  func.func @transform_0(%arg0: i32) -> (i32, i32, i32) {
    %c0_i32 = arith.constant 0 : i32
    %c0_i32_0 = arith.constant 0 : i32
    %c0_i32_1 = arith.constant 0 : i32
    return %arg0, %c0_i32, %c0_i32_0 : i32, i32, i32
  }
  func.func @transform_1(%arg0: i32) -> (i32, i32, i32) {
    %c0_i32 = arith.constant 0 : i32
    %c0_i32_0 = arith.constant 0 : i32
    %c0_i32_1 = arith.constant 0 : i32
    return %arg0, %c0_i32, %c0_i32_0 : i32, i32, i32
  }
  func.func @transform_2(%arg0: i32) -> (i32, i32, i32) {
    %c0_i32 = arith.constant 0 : i32
    %c0_i32_0 = arith.constant 0 : i32
    %c0_i32_1 = arith.constant 0 : i32
    return %arg0, %c0_i32, %c0_i32_0 : i32, i32, i32
  }
  func.func @transform_3(%arg0: i32) -> (i32, i32, i32) {
    %c0_i32 = arith.constant 0 : i32
    %c0_i32_0 = arith.constant 0 : i32
    %c0_i32_1 = arith.constant 0 : i32
    return %arg0, %c0_i32, %c0_i32_0 : i32, i32, i32
  }
  func.func @transform_4(%arg0: i32) -> (i32, i32) {
    %c0_i32 = arith.constant 0 : i32
    %c0_i32_0 = arith.constant 0 : i32
    %c0_i32_1 = arith.constant 0 : i32
    return %c0_i32, %c0_i32_0 : i32, i32
  }
  func.func @transform_5(%arg0: i32) -> (i32, i32) {
    %c0_i32 = arith.constant 0 : i32
    %c0_i32_0 = arith.constant 0 : i32
    %c0_i32_1 = arith.constant 0 : i32
    return %c0_i32, %c0_i32_0 : i32, i32
  }
  func.func @transform_6(%arg0: i32) -> (i32, i32) {
    %c0_i32 = arith.constant 0 : i32
    %c0_i32_0 = arith.constant 0 : i32
    %c0_i32_1 = arith.constant 0 : i32
    return %c0_i32, %c0_i32_0 : i32, i32
  }
  func.func @transform_7(%arg0: i32) -> (i32, i32) {
    %c0_i32 = arith.constant 0 : i32
    %c0_i32_0 = arith.constant 0 : i32
    %c0_i32_1 = arith.constant 0 : i32
    return %c0_i32, %c0_i32_0 : i32, i32
  }
  func.func @transform_8(%arg0: i32) -> (i32, i32, i32) {
    %c0_i32 = arith.constant 0 : i32
    %c0_i32_0 = arith.constant 0 : i32
    %c0_i32_1 = arith.constant 0 : i32
    return %arg0, %c0_i32, %c0_i32_0 : i32, i32, i32
  }
}

</mosaic_0001>

<llo_original>
// kernel: trajectory_gat_forward.1
$region0: #{trajectory_gat_forward.1}
  #allocation0 [shape = 'u32[]', space=smem, size = 0x4, offset = 0x4, fixed_abs, tag = 'smem constant byte address 0x4 - core index']
  #allocation1 [shape = 'u32[144,128]{1,0:T(1,128)}', space=vmem, size = 0x12000, scoped, tag = 'internal scratch']
  %s0 = inlined_call_operand.hbm [shape: bf16[4,128,128], index: 0, kind: input, shape index: {}]
  %s1 = inlined_call_operand.hbm [shape: bf16[4,128,128], index: 1, kind: input, shape index: {}]
  %s2 = inlined_call_operand.hbm [shape: bf16[4,128,128], index: 2, kind: input, shape index: {}]
  %s3 = inlined_call_operand.hbm [shape: f32[4,8,128], index: 3, kind: input, shape index: {}]
  %s4 = inlined_call_operand.hbm [shape: bf16[128,128], index: 4, kind: input, shape index: {}]
  %s5 = inlined_call_operand.hbm [shape: bf16[128,128], index: 5, kind: input, shape index: {}]
  %s6 = inlined_call_operand.hbm [shape: bf16[128,128], index: 6, kind: input, shape index: {}]
  %s7 = inlined_call_operand.hbm [shape: f32[8,128], index: 7, kind: input, shape index: {}]
  %s8 = inlined_call_operand.vmem [shape: f32[4,8,128], index: 8, kind: output, shape index: {}]
  %s9 = sld [smem:[#allocation0]]
  $region97: #{trajectory_gat_forward.1} parent=0
    _
  %s11 = ssub.s32 1, %s9
  %s12 = scalar_select 0, %s11, %s9
  $region1: #{trajectory_gat_forward.1} parent=0
    #allocation2 [shape = 'u8[65536]{0}', space=vmem, size = 0x10000, scoped, tag = 'input window, operand 0']
    #allocation3 [shape = 's32[2]{0}', space=sflag, size = 0x8, scoped, tag = 'scoped memory for trajectory_gat_forward.1']
    #allocation4 [shape = 'u8[65536]{0}', space=vmem, size = 0x10000, scoped, tag = 'input window, operand 1']
    #allocation5 [shape = 's32[2]{0}', space=sflag, size = 0x8, scoped, tag = 'scoped memory for trajectory_gat_forward.1']
    #allocation6 [shape = 'u8[65536]{0}', space=vmem, size = 0x10000, scoped, tag = 'input window, operand 2']
    #allocation7 [shape = 'u8[8192]{0}', space=vmem, size = 0x2000, scoped, tag = 'input window, operand 3']
    #allocation8 [shape = 's32[2]{0}', space=sflag, size = 0x8, scoped, tag = 'scoped memory for trajectory_gat_forward.1']
    #allocation9 [shape = 'u8[32768]{0}', space=vmem, size = 0x8000, scoped, tag = 'input window, operand 4, single buffered']
    #allocation10 [shape = 'u8[32768]{0}', space=vmem, size = 0x8000, scoped, tag = 'input window, operand 5, single buffered']
    #allocation11 [shape = 's32[1]{0}', space=sflag, size = 0x4, scoped, tag = 'scoped memory for trajectory_gat_forward.1']
    #allocation12 [shape = 'u8[32768]{0}', space=vmem, size = 0x8000, scoped, tag = 'input window, operand 6, single buffered']
    #allocation13 [shape = 'u8[4096]{0}', space=vmem, size = 0x1000, scoped, tag = 'input window, operand 7, single buffered']
    #allocation14 [shape = 's32[1]{0}', space=sflag, size = 0x4, scoped, tag = 'scoped memory for trajectory_gat_forward.1']
    %13 = vsyncpa [#allocation3], 0
    %s14 = scalar_lea.sflag [#allocation3], 1
    %15 = vsyncpa %s14, 0
    %16 = vsyncpa [#allocation5], 0
    %s17 = scalar_lea.sflag [#allocation5], 1
    %18 = vsyncpa %s17, 0
    %19 = vsyncpa [#allocation8], 0
    %s20 = scalar_lea.sflag [#allocation8], 1
    %21 = vsyncpa %s20, 0
    %22 = vsyncpa [#allocation11], 0
    %23 = vsyncpa [#allocation14], 0
    loop: start=0, step=1, limit=6
    $region2: #{trajectory_gat_forward.1} parent=1 // loop_pre_header
      _
    $region3: #{trajectory_gat_forward.1} parent=1 // loop_header
      %s25 = sphi 0, %s29
      %p26 = scmp.ge.s32.totalorder %s25, 6
      %s35 = sphi 0, %s37
      %s38 = sphi 0, %s35
      %s39 = sphi 0, %s38
      %s55 = sphi 0, %s39
      %s61 = sphi 0, %s63
      %s64 = sphi 0, %s61
      %s65 = sphi 0, %s64
      %s81 = sphi 0, %s65
      %s87 = sphi 0, %s89
      %s90 = sphi 0, %s87
      %s91 = sphi 0, %s90
      %s107 = sphi 0, %s91
      %s113 = sphi 0, %s115
      %s116 = sphi 0, %s113
      %s117 = sphi 0, %s116
      %s133 = sphi 0, %s117
      %s137 = sphi 0, %s137
      %s139 = sphi 0, %s137
      %s140 = sphi 0, %s139
      %s154 = sphi 0, %s140
      %s158 = sphi 0, %s158
      %s160 = sphi 0, %s158
      %s161 = sphi 0, %s160
      %s175 = sphi 0, %s161
      %s179 = sphi 0, %s179
      %s181 = sphi 0, %s179
      %s182 = sphi 0, %s181
      %s196 = sphi 0, %s182
      %s200 = sphi 0, %s200
      %s202 = sphi 0, %s200
      %s203 = sphi 0, %s202
      %s217 = sphi 0, %s203
      %s223 = sphi 0, %s225
      %s226 = sphi 0, %s223
      %s227 = sphi 0, %s226
      %s243 = sphi 0, %s227
    $region4: #{trajectory_gat_forward.1} parent=1 // loop_header_branch
      %28 = sbr.rel (%p26) target = $region8
    $region5: #{trajectory_gat_forward.1} parent=1 // loop_body
      %s30 = ssub.s32 %s25, 1
      %s31 = ssub.s32 %s25, 2
      %s32 = sadd.s32 %s25, 1
      %s33 = ssub.s32 %s25, %s32
      %p34 = scmp.eq.s32.totalorder %s33, 0
      %s36 = sadd.s32 %s35, 1
      %s37 = scalar_select %p34, %s35, %s36
      %p40 = pneg %p34
      %p41 = scmp.eq.s32.totalorder %s25, 3
      %p42 = por %p40, %p41
      %p43 = scmp.ne.s32.totalorder %s35, %s38
      %p44 = scmp.eq.s32.totalorder %s25, 0
      %p45 = por %p43, %p44
      %p46 = scmp.ne.s32.totalorder %s35, %s38
      %p47 = scmp.eq.s32.totalorder %s30, 3
      %p48 = por %p46, %p47
      %p49 = scmp.ne.s32.totalorder %s38, %s39
      %p50 = scmp.eq.s32.totalorder %s30, 0
      %p51 = por %p49, %p50
      %p52 = scmp.ne.s32.totalorder %s38, %s39
      %p53 = scmp.eq.s32.totalorder %s31, 3
      %p54 = por %p52, %p53
      %p56 = scmp.ne.s32.totalorder %s39, %s55
      %p57 = scmp.eq.s32.totalorder %s31, 0
      %p58 = por %p56, %p57
      %s59 = ssub.s32 %s25, %s32
      %p60 = scmp.eq.s32.totalorder %s59, 0
      %s62 = sadd.s32 %s61, 1
      %s63 = scalar_select %p60, %s61, %s62
      %p66 = pneg %p60
      %p67 = scmp.eq.s32.totalorder %s25, 3
      %p68 = por %p66, %p67
      %p69 = scmp.ne.s32.totalorder %s61, %s64
      %p70 = scmp.eq.s32.totalorder %s25, 0
      %p71 = por %p69, %p70
      %p72 = scmp.ne.s32.totalorder %s61, %s64
      %p73 = scmp.eq.s32.totalorder %s30, 3
      %p74 = por %p72, %p73
      %p75 = scmp.ne.s32.totalorder %s64, %s65
      %p76 = scmp.eq.s32.totalorder %s30, 0
      %p77 = por %p75, %p76
      %p78 = scmp.ne.s32.totalorder %s64, %s65
      %p79 = scmp.eq.s32.totalorder %s31, 3
      %p80 = por %p78, %p79
      %p82 = scmp.ne.s32.totalorder %s65, %s81
      %p83 = scmp.eq.s32.totalorder %s31, 0
      %p84 = por %p82, %p83
      %s85 = ssub.s32 %s25, %s32
      %p86 = scmp.eq.s32.totalorder %s85, 0
      %s88 = sadd.s32 %s87, 1
      %s89 = scalar_select %p86, %s87, %s88
      %p92 = pneg %p86
      %p93 = scmp.eq.s32.totalorder %s25, 3
      %p94 = por %p92, %p93
      %p95 = scmp.ne.s32.totalorder %s87, %s90
      %p96 = scmp.eq.s32.totalorder %s25, 0
      %p97 = por %p95, %p96
      %p98 = scmp.ne.s32.totalorder %s87, %s90
      %p99 = scmp.eq.s32.totalorder %s30, 3
      %p100 = por %p98, %p99
      %p101 = scmp.ne.s32.totalorder %s90, %s91
      %p102 = scmp.eq.s32.totalorder %s30, 0
      %p103 = por %p101, %p102
      %p104 = scmp.ne.s32.totalorder %s90, %s91
      %p105 = scmp.eq.s32.totalorder %s31, 3
      %p106 = por %p104, %p105
      %p108 = scmp.ne.s32.totalorder %s91, %s107
      %p109 = scmp.eq.s32.totalorder %s31, 0
      %p110 = por %p108, %p109
      %s111 = ssub.s32 %s25, %s32
      %p112 = scmp.eq.s32.totalorder %s111, 0
      %s114 = sadd.s32 %s113, 1
      %s115 = scalar_select %p112, %s113, %s114
      %p118 = pneg %p112
      %p119 = scmp.eq.s32.totalorder %s25, 3
      %p120 = por %p118, %p119
      %p121 = scmp.ne.s32.totalorder %s113, %s116
      %p122 = scmp.eq.s32.totalorder %s25, 0
      %p123 = por %p121, %p122
      %p124 = scmp.ne.s32.totalorder %s113, %s116
      %p125 = scmp.eq.s32.totalorder %s30, 3
      %p126 = por %p124, %p125
      %p127 = scmp.ne.s32.totalorder %s116, %s117
      %p128 = scmp.eq.s32.totalorder %s30, 0
      %p129 = por %p127, %p128
      %p130 = scmp.ne.s32.totalorder %s116, %s117
      %p131 = scmp.eq.s32.totalorder %s31, 3
      %p132 = por %p130, %p131
      %p134 = scmp.ne.s32.totalorder %s117, %s133
      %p135 = scmp.eq.s32.totalorder %s31, 0
      %p136 = por %p134, %p135
      %s138 = sadd.s32 %s137, 1
      %p141 = scmp.eq.s32.totalorder %s25, 3
      %p142 = scmp.ne.s32.totalorder %s137, %s139
      %p143 = scmp.eq.s32.totalorder %s25, 0
      %p144 = por %p142, %p143
      %p145 = scmp.ne.s32.totalorder %s137, %s139
      %p146 = scmp.eq.s32.totalorder %s30, 3
      %p147 = por %p145, %p146
      %p148 = scmp.ne.s32.totalorder %s139, %s140
      %p149 = scmp.eq.s32.totalorder %s30, 0
      %p150 = por %p148, %p149
      %p151 = scmp.ne.s32.totalorder %s139, %s140
      %p152 = scmp.eq.s32.totalorder %s31, 3
      %p153 = por %p151, %p152
      %p155 = scmp.ne.s32.totalorder %s140, %s154
      %p156 = scmp.eq.s32.totalorder %s31, 0
      %p157 = por %p155, %p156
      %s159 = sadd.s32 %s158, 1
      %p162 = scmp.eq.s32.totalorder %s25, 3
      %p163 = scmp.ne.s32.totalorder %s158, %s160
      %p164 = scmp.eq.s32.totalorder %s25, 0
      %p165 = por %p163, %p164
      %p166 = scmp.ne.s32.totalorder %s158, %s160
      %p167 = scmp.eq.s32.totalorder %s30, 3
      %p168 = por %p166, %p167
      %p169 = scmp.ne.s32.totalorder %s160, %s161
      %p170 = scmp.eq.s32.totalorder %s30, 0
      %p171 = por %p169, %p170
      %p172 = scmp.ne.s32.totalorder %s160, %s161
      %p173 = scmp.eq.s32.totalorder %s31, 3
      %p174 = por %p172, %p173
      %p176 = scmp.ne.s32.totalorder %s161, %s175
      %p177 = scmp.eq.s32.totalorder %s31, 0
      %p178 = por %p176, %p177
      %s180 = sadd.s32 %s179, 1
      %p183 = scmp.eq.s32.totalorder %s25, 3
      %p184 = scmp.ne.s32.totalorder %s179, %s181
      %p185 = scmp.eq.s32.totalorder %s25, 0
      %p186 = por %p184, %p185
      %p187 = scmp.ne.s32.totalorder %s179, %s181
      %p188 = scmp.eq.s32.totalorder %s30, 3
      %p189 = por %p187, %p188
      %p190 = scmp.ne.s32.totalorder %s181, %s182
      %p191 = scmp.eq.s32.totalorder %s30, 0
      %p192 = por %p190, %p191
      %p193 = scmp.ne.s32.totalorder %s181, %s182
      %p194 = scmp.eq.s32.totalorder %s31, 3
      %p195 = por %p193, %p194
      %p197 = scmp.ne.s32.totalorder %s182, %s196
      %p198 = scmp.eq.s32.totalorder %s31, 0
      %p199 = por %p197, %p198
      %s201 = sadd.s32 %s200, 1
      %p204 = scmp.eq.s32.totalorder %s25, 3
      %p205 = scmp.ne.s32.totalorder %s200, %s202
      %p206 = scmp.eq.s32.totalorder %s25, 0
      %p207 = por %p205, %p206
      %p208 = scmp.ne.s32.totalorder %s200, %s202
      %p209 = scmp.eq.s32.totalorder %s30, 3
      %p210 = por %p208, %p209
      %p211 = scmp.ne.s32.totalorder %s202, %s203
      %p212 = scmp.eq.s32.totalorder %s30, 0
      %p213 = por %p211, %p212
      %p214 = scmp.ne.s32.totalorder %s202, %s203
      %p215 = scmp.eq.s32.totalorder %s31, 3
      %p216 = por %p214, %p215
      %p218 = scmp.ne.s32.totalorder %s203, %s217
      %p219 = scmp.eq.s32.totalorder %s31, 0
      %p220 = por %p218, %p219
      %s221 = ssub.s32 %s25, %s32
      %p222 = scmp.eq.s32.totalorder %s221, 0
      %s224 = sadd.s32 %s223, 1
      %s225 = scalar_select %p222, %s223, %s224
      %p228 = pneg %p222
      %p229 = scmp.eq.s32.totalorder %s25, 3
      %p230 = por %p228, %p229
      %p231 = scmp.ne.s32.totalorder %s223, %s226
      %p232 = scmp.eq.s32.totalorder %s25, 0
      %p233 = por %p231, %p232
      %p234 = scmp.ne.s32.totalorder %s223, %s226
      %p235 = scmp.eq.s32.totalorder %s30, 3
      %p236 = por %p234, %p235
      %p237 = scmp.ne.s32.totalorder %s226, %s227
      %p238 = scmp.eq.s32.totalorder %s30, 0
      %p239 = por %p237, %p238
      %p240 = scmp.ne.s32.totalorder %s226, %s227
      %p241 = scmp.eq.s32.totalorder %s31, 3
      %p242 = por %p240, %p241
      %p244 = scmp.ne.s32.totalorder %s227, %s243
      %p245 = scmp.eq.s32.totalorder %s31, 0
      %p246 = por %p244, %p245
      %p247 = scmp.le.s32.totalorder 1, %s25
      %p248 = scmp.lt.s32.totalorder %s25, 5
      %p249 = pnand %p247, %p248
      %p250 = pneg %p249
      // Predicated region
      $region9: #{trajectory_gat_forward.1} parent=5 // pred_check
        _
      $region10: #{trajectory_gat_forward.1} parent=5 // pred_check_branch
        %252 = sbr.rel (%p249) target = $region12
      $region11: #{trajectory_gat_forward.1} parent=5 // pred_region
        %s253 = ssub.s32 %s25, 1
        // Predicated region
        $region13: #{trajectory_gat_forward.1} parent=11 // pred_check
          %p254 = pneg %p150
        $region14: #{trajectory_gat_forward.1} parent=11 // pred_check_branch
          %256 = sbr.rel (%p254) target = $region16
        $region15: #{trajectory_gat_forward.1} parent=11 // pred_region
          %s258 = ssub.s32 1024, 1024
          %259 = vsyncadd [#allocation8], %s258
          %s260 = sshll.u32 [#allocation9], 4
          %s261 = int_to_ptr.vmem [resolvable:$true] %s260
          %266 = dma.hbm_to_vmem [thread:$0]  %s4, 1024, %s261, [#allocation8], 64, 64, 4
        $region16: #{trajectory_gat_forward.1} parent=11 // pred_fallthru
          _
        // Predicated region
        $region17: #{trajectory_gat_forward.1} parent=11 // pred_check
          %p267 = pneg %p171
        $region18: #{trajectory_gat_forward.1} parent=11 // pred_check_branch
          %269 = sbr.rel (%p267) target = $region20
        $region19: #{trajectory_gat_forward.1} parent=11 // pred_region
          %s271 = ssub.s32 1024, 1024
          %272 = vsyncadd [#allocation11], %s271
          %s273 = sshll.u32 [#allocation10], 4
          %s274 = int_to_ptr.vmem [resolvable:$true] %s273
          %279 = dma.hbm_to_vmem [thread:$0]  %s5, 1024, %s274, [#allocation11], 64, 64, 4
        $region20: #{trajectory_gat_forward.1} parent=11 // pred_fallthru
          _
        // Predicated region
        $region21: #{trajectory_gat_forward.1} parent=11 // pred_check
          %p280 = pneg %p192
        $region22: #{trajectory_gat_forward.1} parent=11 // pred_check_branch
          %282 = sbr.rel (%p280) target = $region24
        $region23: #{trajectory_gat_forward.1} parent=11 // pred_region
          %s284 = ssub.s32 1024, 1024
          %285 = vsyncadd [#allocation11], %s284
          %s286 = sshll.u32 [#allocation12], 4
          %s287 = int_to_ptr.vmem [resolvable:$true] %s286
          %292 = dma.hbm_to_vmem [thread:$0]  %s6, 1024, %s287, [#allocation11], 64, 64, 4
        $region24: #{trajectory_gat_forward.1} parent=11 // pred_fallthru
          _
        // Predicated region
        $region25: #{trajectory_gat_forward.1} parent=11 // pred_check
          %p293 = pneg %p213
        $region26: #{trajectory_gat_forward.1} parent=11 // pred_check_branch
          %295 = sbr.rel (%p293) target = $region28
        $region27: #{trajectory_gat_forward.1} parent=11 // pred_region
          %s297 = ssub.s32 128, 128
          %298 = vsyncadd [#allocation14], %s297
          %s300 = sshll.u32 [#allocation13], 4
          %s301 = int_to_ptr.vmem [resolvable:$true] %s300
          %303 = dma.hbm_to_vmem [thread:$0]  %s7, 128, %s301, [#allocation14]
        $region28: #{trajectory_gat_forward.1} parent=11 // pred_fallthru
          _
      $region12: #{trajectory_gat_forward.1} parent=5 // pred_fallthru
        _
      %p304 = scmp.lt.s32.totalorder %s25, 4
      // Predicated region
      $region29: #{trajectory_gat_forward.1} parent=5 // pred_check
        %p305 = pneg %p304
      $region30: #{trajectory_gat_forward.1} parent=5 // pred_check_branch
        %307 = sbr.rel (%p305) target = $region32
      $region31: #{trajectory_gat_forward.1} parent=5 // pred_region
        // Predicated region
        $region33: #{trajectory_gat_forward.1} parent=31 // pred_check
          %p308 = pneg %p45
        $region34: #{trajectory_gat_forward.1} parent=31 // pred_check_branch
          %310 = sbr.rel (%p308) target = $region36
        $region35: #{trajectory_gat_forward.1} parent=31 // pred_region
          %s311 = sand.u32 %s35, 1
          %s312 = scalar_lea.sflag [#allocation3], %s311
          %s313 = sand.u32 %s35, 1
          %s314 = smul.addr %s313, 64
          %s315 = scalar_lea.vmem [#allocation2], %s314
          %s317 = ssub.s32 1024, 1024
          %318 = vsyncadd %s312, %s317
          %s319 = smul.addr %s25, 16
          %s320 = smul.addr %s319, 64
          %s321 = scalar_lea.hbm %s0, %s320
          %s322 = sshll.u32 %s315, 4
          %s323 = int_to_ptr.vmem [resolvable:$true] %s322
          %328 = dma.hbm_to_vmem [thread:$0]  %s321, 1024, %s323, %s312, 64, 64, 4
        $region36: #{trajectory_gat_forward.1} parent=31 // pred_fallthru
          _
        // Predicated region
        $region37: #{trajectory_gat_forward.1} parent=31 // pred_check
          %p329 = pneg %p71
        $region38: #{trajectory_gat_forward.1} parent=31 // pred_check_branch
          %331 = sbr.rel (%p329) target = $region40
        $region39: #{trajectory_gat_forward.1} parent=31 // pred_region
          %s332 = sand.u32 %s25, 1
          %s333 = scalar_lea.sflag [#allocation5], %s332
          %s334 = sand.u32 %s61, 1
          %s335 = smul.addr %s334, 64
          %s336 = scalar_lea.vmem [#allocation4], %s335
          %s338 = ssub.s32 1024, 1024
          %339 = vsyncadd %s333, %s338
          %s340 = smul.addr %s25, 16
          %s341 = smul.addr %s340, 64
          %s342 = scalar_lea.hbm %s1, %s341
          %s343 = sshll.u32 %s336, 4
          %s344 = int_to_ptr.vmem [resolvable:$true] %s343
          %349 = dma.hbm_to_vmem [thread:$0]  %s342, 1024, %s344, %s333, 64, 64, 4
        $region40: #{trajectory_gat_forward.1} parent=31 // pred_fallthru
          _
        // Predicated region
        $region41: #{trajectory_gat_forward.1} parent=31 // pred_check
          %p350 = pneg %p97
        $region42: #{trajectory_gat_forward.1} parent=31 // pred_check_branch
          %352 = sbr.rel (%p350) target = $region44
        $region43: #{trajectory_gat_forward.1} parent=31 // pred_region
          %s353 = sand.u32 %s25, 1
          %s354 = scalar_lea.sflag [#allocation5], %s353
          %s355 = sand.u32 %s87, 1
          %s356 = smul.addr %s355, 64
          %s357 = scalar_lea.vmem [#allocation6], %s356
          %s359 = ssub.s32 1024, 1024
          %360 = vsyncadd %s354, %s359
          %s361 = smul.addr %s25, 16
          %s362 = smul.addr %s361, 64
          %s363 = scalar_lea.hbm %s2, %s362
          %s364 = sshll.u32 %s357, 4
          %s365 = int_to_ptr.vmem [resolvable:$true] %s364
          %370 = dma.hbm_to_vmem [thread:$0]  %s363, 1024, %s365, %s354, 64, 64, 4
        $region44: #{trajectory_gat_forward.1} parent=31 // pred_fallthru
          _
        // Predicated region
        $region45: #{trajectory_gat_forward.1} parent=31 // pred_check
          %p371 = pneg %p123
        $region46: #{trajectory_gat_forward.1} parent=31 // pred_check_branch
          %373 = sbr.rel (%p371) target = $region48
        $region47: #{trajectory_gat_forward.1} parent=31 // pred_region
          %s374 = sand.u32 %s25, 1
          %s375 = scalar_lea.sflag [#allocation8], %s374
          %s376 = sand.u32 %s113, 1
          %s377 = smul.addr %s376, 8
          %s378 = scalar_lea.vmem [#allocation7], %s377
          %s380 = ssub.s32 128, 128
          %381 = vsyncadd %s375, %s380
          %s382 = smul.addr %s25, 128
          %s383 = scalar_lea.hbm %s3, %s382
          %s385 = sshll.u32 %s378, 4
          %s386 = int_to_ptr.vmem [resolvable:$true] %s385
          %388 = dma.hbm_to_vmem [thread:$0]  %s383, 128, %s386, %s375
        $region48: #{trajectory_gat_forward.1} parent=31 // pred_fallthru
          _
      $region32: #{trajectory_gat_forward.1} parent=5 // pred_fallthru
        _
      %p389 = scmp.le.s32.totalorder 1, %s25
      %p390 = scmp.lt.s32.totalorder %s25, 5
      %p391 = pnand %p389, %p390
      %p392 = pneg %p391
      // Predicated region
      $region49: #{trajectory_gat_forward.1} parent=5 // pred_check
        _
      $region50: #{trajectory_gat_forward.1} parent=5 // pred_check_branch
        %394 = sbr.rel (%p391) target = $region52
      $region51: #{trajectory_gat_forward.1} parent=5 // pred_region
        %s395 = ssub.s32 %s25, 1
        %s396 = sand.u32 %s38, 1
        %s397 = scalar_lea.sflag [#allocation3], %s396
        %s398 = sand.u32 %s38, 1
        %s399 = smul.addr %s398, 64
        %s400 = scalar_lea.vmem [#allocation2], %s399
        // Predicated region
        $region53: #{trajectory_gat_forward.1} parent=51 // pred_check
          %p401 = pneg %p51
        $region54: #{trajectory_gat_forward.1} parent=51 // pred_check_branch
          %403 = sbr.rel (%p401) target = $region56
        $region55: #{trajectory_gat_forward.1} parent=51 // pred_region
          %404 = dma.done %s397, 1024
        $region56: #{trajectory_gat_forward.1} parent=51 // pred_fallthru
          _
        %s405 = sand.u32 %s30, 1
        %s406 = scalar_lea.sflag [#allocation5], %s405
        %s407 = sand.u32 %s64, 1
        %s408 = smul.addr %s407, 64
        %s409 = scalar_lea.vmem [#allocation4], %s408
        // Predicated region
        $region57: #{trajectory_gat_forward.1} parent=51 // pred_check
          %p410 = pneg %p77
        $region58: #{trajectory_gat_forward.1} parent=51 // pred_check_branch
          %412 = sbr.rel (%p410) target = $region60
        $region59: #{trajectory_gat_forward.1} parent=51 // pred_region
          %413 = dma.done %s406, 1024
        $region60: #{trajectory_gat_forward.1} parent=51 // pred_fallthru
          _
        %s414 = sand.u32 %s30, 1
        %s415 = scalar_lea.sflag [#allocation5], %s414
        %s416 = sand.u32 %s90, 1
        %s417 = smul.addr %s416, 64
        %s418 = scalar_lea.vmem [#allocation6], %s417
        // Predicated region
        $region61: #{trajectory_gat_forward.1} parent=51 // pred_check
          %p419 = pneg %p103
        $region62: #{trajectory_gat_forward.1} parent=51 // pred_check_branch
          %421 = sbr.rel (%p419) target = $region64
        $region63: #{trajectory_gat_forward.1} parent=51 // pred_region
          %422 = dma.done %s415, 1024
        $region64: #{trajectory_gat_forward.1} parent=51 // pred_fallthru
          _
        %s423 = sand.u32 %s30, 1
        %s424 = scalar_lea.sflag [#allocation8], %s423
        %s425 = sand.u32 %s116, 1
        %s426 = smul.addr %s425, 8
        %s427 = scalar_lea.vmem [#allocation7], %s426
        // Predicated region
        $region65: #{trajectory_gat_forward.1} parent=51 // pred_check
          %p428 = pneg %p129
        $region66: #{trajectory_gat_forward.1} parent=51 // pred_check_branch
          %430 = sbr.rel (%p428) target = $region68
        $region67: #{trajectory_gat_forward.1} parent=51 // pred_region
          %431 = dma.done %s424, 128
        $region68: #{trajectory_gat_forward.1} parent=51 // pred_fallthru
          _
        // Predicated region
        $region69: #{trajectory_gat_forward.1} parent=51 // pred_check
          %p432 = pneg %p150
        $region70: #{trajectory_gat_forward.1} parent=51 // pred_check_branch
          %434 = sbr.rel (%p432) target = $region72
        $region71: #{trajectory_gat_forward.1} parent=51 // pred_region
          %435 = dma.done [#allocation8], 1024
        $region72: #{trajectory_gat_forward.1} parent=51 // pred_fallthru
          _
        // Predicated region
        $region73: #{trajectory_gat_forward.1} parent=51 // pred_check
          %p436 = pneg %p171
        $region74: #{trajectory_gat_forward.1} parent=51 // pred_check_branch
          %438 = sbr.rel (%p436) target = $region76
        $region75: #{trajectory_gat_forward.1} parent=51 // pred_region
          %439 = dma.done [#allocation11], 1024
        $region76: #{trajectory_gat_forward.1} parent=51 // pred_fallthru
          _
        // Predicated region
        $region77: #{trajectory_gat_forward.1} parent=51 // pred_check
          %p440 = pneg %p192
        $region78: #{trajectory_gat_forward.1} parent=51 // pred_check_branch
          %442 = sbr.rel (%p440) target = $region80
        $region79: #{trajectory_gat_forward.1} parent=51 // pred_region
          %443 = dma.done [#allocation11], 1024
        $region80: #{trajectory_gat_forward.1} parent=51 // pred_fallthru
          _
        // Predicated region
        $region81: #{trajectory_gat_forward.1} parent=51 // pred_check
          %p444 = pneg %p213
        $region82: #{trajectory_gat_forward.1} parent=51 // pred_check_branch
          %446 = sbr.rel (%p444) target = $region84
        $region83: #{trajectory_gat_forward.1} parent=51 // pred_region
          %447 = dma.done [#allocation14], 128
        $region84: #{trajectory_gat_forward.1} parent=51 // pred_fallthru
          _
        %s448 = sand.u32 %s38, 1
        %s449 = scalar_lea.sflag [#allocation3], %s448
        %s450 = sand.u32 %s38, 1
        %s451 = smul.addr %s450, 64
        %s452 = scalar_lea.vmem [#allocation2], %s451
        %p453 = pneg %p51
        %p454 = pneg %p48
        %s455 = sand.u32 %s30, 1
        %s456 = scalar_lea.sflag [#allocation5], %s455
        %s457 = sand.u32 %s64, 1
        %s458 = smul.addr %s457, 64
        %s459 = scalar_lea.vmem [#allocation4], %s458
        %p460 = pneg %p77
        %p461 = pneg %p74
        %s462 = sand.u32 %s30, 1
        %s463 = scalar_lea.sflag [#allocation5], %s462
        %s464 = sand.u32 %s90, 1
        %s465 = smul.addr %s464, 64
        %s466 = scalar_lea.vmem [#allocation6], %s465
        %p467 = pneg %p103
        %p468 = pneg %p100
        %s469 = sand.u32 %s30, 1
        %s470 = scalar_lea.sflag [#allocation8], %s469
        %s471 = sand.u32 %s116, 1
        %s472 = smul.addr %s471, 8
        %s473 = scalar_lea.vmem [#allocation7], %s472
        %p474 = pneg %p129
        %p475 = pneg %p126
        %p476 = pneg %p150
        %p477 = pneg %p147
        %p478 = pneg %p171
        %p479 = pneg %p168
        %p480 = pneg %p192
        %p481 = pneg %p189
        %p482 = pneg %p213
        %p483 = pneg %p210
        %p484 = pneg %p239
        %p485 = pneg %p236
        %p486 = scmp.lt.s32.totalorder %s30, 3
        %s487 = scalar_select %p486, %s30, 3
        %s488 = smul.addr %s487, 8
        %s489 = scalar_lea.vmem %s8, %s488
        %p490 = scmp.lt.s32.totalorder %s30, 3
        %s491 = scalar_select %p490, %s30, 3
        %s492 = smul.addr %s491, 8
        %s493 = scalar_lea.vmem %s8, %s492
        %v495 = vld [vmem:[%s400] sm:$0xf]
        %v496 = vld [vmem:[%s400 + $0x4] sm:$0xf]
        %v497 = vld [vmem:[%s400 + $0x8] sm:$0xf]
        %v498 = vld [vmem:[%s400 + $0xc] sm:$0xf]
        %v499 = vld [vmem:[%s400 + $0x10] sm:$0xf]
        %v500 = vld [vmem:[%s400 + $0x14] sm:$0xf]
        %v501 = vld [vmem:[%s400 + $0x18] sm:$0xf]
        %v502 = vld [vmem:[%s400 + $0x1c] sm:$0xf]
        %v503 = vld [vmem:[%s400 + $0x20] sm:$0xf]
        %v504 = vld [vmem:[%s400 + $0x24] sm:$0xf]
        %v505 = vld [vmem:[%s400 + $0x28] sm:$0xf]
        %v506 = vld [vmem:[%s400 + $0x2c] sm:$0xf]
        %v507 = vld [vmem:[%s400 + $0x30] sm:$0xf]
        %v508 = vld [vmem:[%s400 + $0x34] sm:$0xf]
        %v509 = vld [vmem:[%s400 + $0x38] sm:$0xf]
        %v510 = vld [vmem:[%s400 + $0x3c] sm:$0xf]
        %v511 = vld [vmem:[#allocation13] sm:$0x1]
        %v512 = vld [vmem:[#allocation13 + $0x1] sm:$0x1]
        %v513 = vld [vmem:[#allocation13 + $0x2] sm:$0x1]
        %v514 = vld [vmem:[#allocation9] sm:$0xf]
        %v515 = vld [vmem:[#allocation9 + $0x4] sm:$0xf]
        %v516 = vld [vmem:[#allocation9 + $0x8] sm:$0xf]
        %v517 = vld [vmem:[#allocation9 + $0xc] sm:$0xf]
        %v518 = vld [vmem:[#allocation9 + $0x10] sm:$0xf]
        %v519 = vld [vmem:[#allocation9 + $0x14] sm:$0xf]
        %v520 = vld [vmem:[#allocation9 + $0x18] sm:$0xf]
        %v521 = vld [vmem:[#allocation9 + $0x1c] sm:$0xf]
        %v522 = vld [vmem:[#allocation9 + $0x20] sm:$0xf]
        %v523 = vld [vmem:[#allocation9 + $0x24] sm:$0xf]
        %v524 = vld [vmem:[#allocation9 + $0x28] sm:$0xf]
        %v525 = vld [vmem:[#allocation9 + $0x2c] sm:$0xf]
        %v526 = vld [vmem:[#allocation9 + $0x30] sm:$0xf]
        %v527 = vld [vmem:[#allocation9 + $0x34] sm:$0xf]
        %v528 = vld [vmem:[#allocation9 + $0x38] sm:$0xf]
        %v529 = vld [vmem:[#allocation9 + $0x3c] sm:$0xf]
        %v546 = vunpack.c.l.b16 %v495
        %v547 = vunpack.c.l.b16 %v496
        %v548 = vunpack.c.l.b16 %v497
        %v549 = vunpack.c.l.b16 %v498
        %v550 = vunpack.c.l.b16 %v499
        %v551 = vunpack.c.l.b16 %v500
        %v552 = vunpack.c.l.b16 %v501
        %v553 = vunpack.c.l.b16 %v502
        %v554 = vunpack.c.l.b16 %v503
        %v555 = vunpack.c.l.b16 %v504
        %v556 = vunpack.c.l.b16 %v505
        %v557 = vunpack.c.l.b16 %v506
        %v558 = vunpack.c.l.b16 %v507
        %v559 = vunpack.c.l.b16 %v508
        %v560 = vunpack.c.l.b16 %v509
        %v561 = vunpack.c.l.b16 %v510
        %v562 = vpack.c.b16 %v547, %v546
        %v563 = vpack.c.b16 %v549, %v548
        %v564 = vpack.c.b16 %v551, %v550
        %v565 = vpack.c.b16 %v553, %v552
        %v566 = vpack.c.b16 %v555, %v554
        %v567 = vpack.c.b16 %v557, %v556
        %v568 = vpack.c.b16 %v559, %v558
        %v569 = vpack.c.b16 %v561, %v560
        %v594 = vunpack.c.l.b16 %v514
        %v595 = vunpack.c.l.b16 %v515
        %v596 = vunpack.c.l.b16 %v516
        %v597 = vunpack.c.l.b16 %v517
        %v598 = vunpack.c.l.b16 %v518
        %v599 = vunpack.c.l.b16 %v519
        %v600 = vunpack.c.l.b16 %v520
        %v601 = vunpack.c.l.b16 %v521
        %v602 = vunpack.c.l.b16 %v522
        %v603 = vunpack.c.l.b16 %v523
        %v604 = vunpack.c.l.b16 %v524
        %v605 = vunpack.c.l.b16 %v525
        %v606 = vunpack.c.l.b16 %v526
        %v607 = vunpack.c.l.b16 %v527
        %v608 = vunpack.c.l.b16 %v528
        %v609 = vunpack.c.l.b16 %v529
        %v610 = vpack.c.b16 %v595, %v594
        %v611 = vpack.c.b16 %v597, %v596
        %v612 = vpack.c.b16 %v599, %v598
        %v613 = vpack.c.b16 %v601, %v600
        %v614 = vpack.c.b16 %v603, %v602
        %v615 = vpack.c.b16 %v605, %v604
        %v616 = vpack.c.b16 %v607, %v606
        %v617 = vpack.c.b16 %v609, %v608
        %626 = vmatprep.subr.bf16.mxu0 0
        %627 = vmatpush1.bf16.msra.mxu0 %v617
        %628 = vmatprep.subr.bf16.mxu0 0
        %629 = vmatpush1.bf16.msra.mxu0 %v616
        %630 = vmatprep.subr.bf16.mxu0 0
        %631 = vmatpush1.bf16.msra.mxu0 %v615
        %632 = vmatprep.subr.bf16.mxu0 0
        %633 = vmatpush1.bf16.msra.mxu0 %v614
        %634 = vmatprep.subr.bf16.mxu0 0
        %635 = vmatpush1.bf16.msra.mxu0 %v613
        %636 = vmatprep.subr.bf16.mxu0 0
        %637 = vmatpush1.bf16.msra.mxu0 %v612
        %638 = vmatprep.subr.bf16.mxu0 0
        %639 = vmatpush1.bf16.msra.mxu0 %v611
        %640 = vmatprep.subr.bf16.mxu0 0
        %641 = vmatpush1.bf16.msra.mxu0 %v610
        %642 = vmatprep.subr.bf16.mxu0 0
        %643 = vmatpush2.bf16.msra.mxu0 0
        %644 = vmatprep.subr.bf16.mxu0 0
        %645 = vmatpush2.bf16.msra.mxu0 0
        %646 = vmatprep.subr.bf16.mxu0 0
        %647 = vmatpush2.bf16.msra.mxu0 0
        %648 = vmatprep.subr.bf16.mxu0 0
        %649 = vmatpush2.bf16.msra.mxu0 0
        %650 = vmatprep.subr.bf16.mxu0 0
        %651 = vmatpush2.bf16.msra.mxu0 0
        %652 = vmatprep.subr.bf16.mxu0 0
        %653 = vmatpush2.bf16.msra.mxu0 0
        %654 = vmatprep.subr.bf16.mxu0 0
        %655 = vmatpush2.bf16.msra.mxu0 0
        %656 = vmatprep.subr.bf16.mxu0 0
        %657 = vmatpush2.bf16.msra.mxu0 0
        %658 = vmatprep.mubr.bf16.mxu0 0
        %659 = vmatmul.mubr.bf16.gmra.mxu0 %v562
        %v660 = vpop.f32.mrf.mxu0
        %v661 = vadd.f32 0.0, %v660
        %v662 = vpop.f32.mrf.mxu0
        %v663 = vpop.f32.mrf.mxu0
        %v664 = vadd.f32 0.0, %v663
        %v665 = vpop.f32.mrf.mxu0
        %666 = vmatprep.mubr.bf16.mxu0 0
        %667 = vmatmul.mubr.bf16.gmra.mxu0 %v563
        %v668 = vpop.f32.mrf.mxu0
        %v669 = vadd.f32 0.0, %v668
        %v670 = vpop.f32.mrf.mxu0
        %v671 = vpop.f32.mrf.mxu0
        %v672 = vadd.f32 0.0, %v671
        %v673 = vpop.f32.mrf.mxu0
        %674 = vmatprep.mubr.bf16.mxu0 0
        %675 = vmatmul.mubr.bf16.gmra.mxu0 %v564
        %v676 = vpop.f32.mrf.mxu0
        %v677 = vadd.f32 0.0, %v676
        %v678 = vpop.f32.mrf.mxu0
        %v679 = vpop.f32.mrf.mxu0
        %v680 = vadd.f32 0.0, %v679
        %v681 = vpop.f32.mrf.mxu0
        %682 = vmatprep.mubr.bf16.mxu0 0
        %683 = vmatmul.mubr.bf16.gmra.mxu0 %v565
        %v684 = vpop.f32.mrf.mxu0
        %v685 = vadd.f32 0.0, %v684
        %v686 = vpop.f32.mrf.mxu0
        %v687 = vpop.f32.mrf.mxu0
        %v688 = vadd.f32 0.0, %v687
        %v689 = vpop.f32.mrf.mxu0
        %690 = vmatprep.mubr.bf16.mxu0 0
        %691 = vmatmul.mubr.bf16.gmra.mxu0 %v566
        %v692 = vpop.f32.mrf.mxu0
        %v693 = vadd.f32 0.0, %v692
        %v694 = vpop.f32.mrf.mxu0
        %v695 = vpop.f32.mrf.mxu0
        %v696 = vadd.f32 0.0, %v695
        %v697 = vpop.f32.mrf.mxu0
        %698 = vmatprep.mubr.bf16.mxu0 0
        %699 = vmatmul.mubr.bf16.gmra.mxu0 %v567
        %v700 = vpop.f32.mrf.mxu0
        %v701 = vadd.f32 0.0, %v700
        %v702 = vpop.f32.mrf.mxu0
        %v703 = vpop.f32.mrf.mxu0
        %v704 = vadd.f32 0.0, %v703
        %v705 = vpop.f32.mrf.mxu0
        %706 = vmatprep.mubr.bf16.mxu0 0
        %707 = vmatmul.mubr.bf16.gmra.mxu0 %v568
        %v708 = vpop.f32.mrf.mxu0
        %v709 = vadd.f32 0.0, %v708
        %v710 = vpop.f32.mrf.mxu0
        %v711 = vpop.f32.mrf.mxu0
        %v712 = vadd.f32 0.0, %v711
        %v713 = vpop.f32.mrf.mxu0
        %714 = vmatprep.mubr.bf16.mxu0 0
        %715 = vmatmul.mubr.bf16.gmra.mxu0 %v569
        %v716 = vpop.f32.mrf.mxu0
        %v717 = vadd.f32 0.0, %v716
        %v718 = vpop.f32.mrf.mxu0
        %v719 = vpop.f32.mrf.mxu0
        %v720 = vadd.f32 0.0, %v719
        %v721 = vpop.f32.mrf.mxu0
        %722 = vdwg.mxu0
        %v723 = vlaneseq
        %v724 = vshrl.u32 %v723, 7
        %v725 = vsub.s32 0, %v724
        %v726 = vrot.slane %v513, %v725
        %v727 = vmul.f32 %v661, %v726
        %v728 = vmul.f32 %v664, %v726
        %v729 = vmul.f32 %v669, %v726
        %v730 = vmul.f32 %v672, %v726
        %v731 = vmul.f32 %v677, %v726
        %v732 = vmul.f32 %v680, %v726
        %v733 = vmul.f32 %v685, %v726
        %v734 = vmul.f32 %v688, %v726
        %v735 = vmul.f32 %v693, %v726
        %v736 = vmul.f32 %v696, %v726
        %v737 = vmul.f32 %v701, %v726
        %v738 = vmul.f32 %v704, %v726
        %v739 = vmul.f32 %v709, %v726
        %v740 = vmul.f32 %v712, %v726
        %v741 = vmul.f32 %v717, %v726
        %v742 = vmul.f32 %v720, %v726
        %743 = vadd.xlane.f32.xlu0 %v727
        %v744 = vpop.xlane.xlu0 %743
        %745 = vadd.xlane.f32.xlu0 %v728
        %v746 = vpop.xlane.xlu0 %745
        %747 = vadd.xlane.f32.xlu0 %v729
        %v748 = vpop.xlane.xlu0 %747
        %749 = vadd.xlane.f32.xlu0 %v730
        %v750 = vpop.xlane.xlu0 %749
        %751 = vadd.xlane.f32.xlu0 %v731
        %v752 = vpop.xlane.xlu0 %751
        %753 = vadd.xlane.f32.xlu0 %v732
        %v754 = vpop.xlane.xlu0 %753
        %755 = vadd.xlane.f32.xlu0 %v733
        %v756 = vpop.xlane.xlu0 %755
        %757 = vadd.xlane.f32.xlu0 %v734
        %v758 = vpop.xlane.xlu0 %757
        %759 = vadd.xlane.f32.xlu0 %v735
        %v760 = vpop.xlane.xlu0 %759
        %761 = vadd.xlane.f32.xlu0 %v736
        %v762 = vpop.xlane.xlu0 %761
        %763 = vadd.xlane.f32.xlu0 %v737
        %v764 = vpop.xlane.xlu0 %763
        %765 = vadd.xlane.f32.xlu0 %v738
        %v766 = vpop.xlane.xlu0 %765
        %767 = vadd.xlane.f32.xlu0 %v739
        %v768 = vpop.xlane.xlu0 %767
        %769 = vadd.xlane.f32.xlu0 %v740
        %v770 = vpop.xlane.xlu0 %769
        %771 = vadd.xlane.f32.xlu0 %v741
        %v772 = vpop.xlane.xlu0 %771
        %773 = vadd.xlane.f32.xlu0 %v742
        %v774 = vpop.xlane.xlu0 %773
        %775 = vmatprep.subr.mxu0 0.0
        %776 = vmatpush1.xpose.msra.mxu0 %v720
        %777 = vmatprep.subr.mxu0 0.0
        %778 = vmatpush1.xpose.msra.mxu0 %v717
        %779 = vmatprep.subr.mxu0 0.0
        %780 = vmatpush1.xpose.msra.mxu0 %v712
        %781 = vmatprep.subr.mxu0 0.0
        %782 = vmatpush1.xpose.msra.mxu0 %v709
        %783 = vmatprep.subr.mxu0 0.0
        %784 = vmatpush1.xpose.msra.mxu0 %v704
        %785 = vmatprep.subr.mxu0 0.0
        %786 = vmatpush1.xpose.msra.mxu0 %v701
        %787 = vmatprep.subr.mxu0 0.0
        %788 = vmatpush1.xpose.msra.mxu0 %v696
        %789 = vmatprep.subr.mxu0 0.0
        %790 = vmatpush1.xpose.msra.mxu0 %v693
        %791 = vmatprep.subr.mxu0 0.0
        %792 = vmatpush1.xpose.msra.mxu0 %v688
        %793 = vmatprep.subr.mxu0 0.0
        %794 = vmatpush1.xpose.msra.mxu0 %v685
        %795 = vmatprep.subr.mxu0 0.0
        %796 = vmatpush1.xpose.msra.mxu0 %v680
        %797 = vmatprep.subr.mxu0 0.0
        %798 = vmatpush1.xpose.msra.mxu0 %v677
        %799 = vmatprep.subr.mxu0 0.0
        %800 = vmatpush1.xpose.msra.mxu0 %v672
        %801 = vmatprep.subr.mxu0 0.0
        %802 = vmatpush1.xpose.msra.mxu0 %v669
        %803 = vmatprep.subr.mxu0 0.0
        %804 = vmatpush1.xpose.msra.mxu0 %v664
        %805 = vmatprep.subr.mxu0 0.0
        %806 = vmatpush1.xpose.msra.mxu0 %v661
        %807 = vmatprep.subr.mxu0 0.0
        %808 = vmatpush2.xpose.msra.mxu0 0.0
        %809 = vmatprep.subr.mxu0 0.0
        %810 = vmatpush2.xpose.msra.mxu0 0.0
        %811 = vmatprep.subr.mxu0 0.0
        %812 = vmatpush2.xpose.msra.mxu0 0.0
        %813 = vmatprep.subr.mxu0 0.0
        %814 = vmatpush2.xpose.msra.mxu0 0.0
        %815 = vmatprep.subr.mxu0 0.0
        %816 = vmatpush2.xpose.msra.mxu0 0.0
        %817 = vmatprep.subr.mxu0 0.0
        %818 = vmatpush2.xpose.msra.mxu0 0.0
        %819 = vmatprep.subr.mxu0 0.0
        %820 = vmatpush2.xpose.msra.mxu0 0.0
        %821 = vmatprep.subr.mxu0 0.0
        %822 = vmatpush2.xpose.msra.mxu0 0.0
        %823 = vmatprep.subr.mxu0 0.0
        %824 = vmatpush2.xpose.msra.mxu0 0.0
        %825 = vmatprep.subr.mxu0 0.0
        %826 = vmatpush2.xpose.msra.mxu0 0.0
        %827 = vmatprep.subr.mxu0 0.0
        %828 = vmatpush2.xpose.msra.mxu0 0.0
        %829 = vmatprep.subr.mxu0 0.0
        %830 = vmatpush2.xpose.msra.mxu0 0.0
        %831 = vmatprep.subr.mxu0 0.0
        %832 = vmatpush2.xpose.msra.mxu0 0.0
        %833 = vmatprep.subr.mxu0 0.0
        %834 = vmatpush2.xpose.msra.mxu0 0.0
        %835 = vmatprep.subr.mxu0 0.0
        %836 = vmatpush2.xpose.msra.mxu0 0.0
        %837 = vmatprep.subr.mxu0 0.0
        %838 = vmatpush2.xpose.msra.mxu0 0.0
        %839 = vmatprep.mubr.f32.mxu0 0.0
        %840 = vmatmul.mubr.f32.gmra.mxu0 %v512
        %v841 = vpop.f32.mrf.mxu0
        %v842 = vadd.f32 0.0, %v841
        %v843 = vpop.f32.mrf.mxu0
        %844 = vdwg.mxu0
        %v845 = vlaneseq
        %v846 = vshrl.u32 %v845, 7
        %v847 = vsub.s32 0, %v846
        %v848 = vrot.slane %v842, %v847
        %v849 = vadd.f32 %v744, %v848
        %v850 = vadd.f32 %v746, %v848
        %v851 = vadd.f32 %v748, %v848
        %v852 = vadd.f32 %v750, %v848
        %v853 = vadd.f32 %v752, %v848
        %v854 = vadd.f32 %v754, %v848
        %v855 = vadd.f32 %v756, %v848
        %v856 = vadd.f32 %v758, %v848
        %v857 = vadd.f32 %v760, %v848
        %v858 = vadd.f32 %v762, %v848
        %v859 = vadd.f32 %v764, %v848
        %v860 = vadd.f32 %v766, %v848
        %v861 = vadd.f32 %v768, %v848
        %v862 = vadd.f32 %v770, %v848
        %v863 = vadd.f32 %v772, %v848
        %v864 = vadd.f32 %v774, %v848
        %vm865 = vcmp.gt.f32.partialorder %v849, 0.0
        %vm866 = vcmp.gt.f32.partialorder %v850, 0.0
        %vm867 = vcmp.gt.f32.partialorder %v851, 0.0
        %vm868 = vcmp.gt.f32.partialorder %v852, 0.0
        %vm869 = vcmp.gt.f32.partialorder %v853, 0.0
        %vm870 = vcmp.gt.f32.partialorder %v854, 0.0
        %vm871 = vcmp.gt.f32.partialorder %v855, 0.0
        %vm872 = vcmp.gt.f32.partialorder %v856, 0.0
        %vm873 = vcmp.gt.f32.partialorder %v857, 0.0
        %vm874 = vcmp.gt.f32.partialorder %v858, 0.0
        %vm875 = vcmp.gt.f32.partialorder %v859, 0.0
        %vm876 = vcmp.gt.f32.partialorder %v860, 0.0
        %vm877 = vcmp.gt.f32.partialorder %v861, 0.0
        %vm878 = vcmp.gt.f32.partialorder %v862, 0.0
        %vm879 = vcmp.gt.f32.partialorder %v863, 0.0
        %vm880 = vcmp.gt.f32.partialorder %v864, 0.0
        %v881 = vmul.f32 %v849, 0.2
        %v882 = vmul.f32 %v850, 0.2
        %v883 = vmul.f32 %v851, 0.2
        %v884 = vmul.f32 %v852, 0.2
        %v885 = vmul.f32 %v853, 0.2
        %v886 = vmul.f32 %v854, 0.2
        %v887 = vmul.f32 %v855, 0.2
        %v888 = vmul.f32 %v856, 0.2
        %v889 = vmul.f32 %v857, 0.2
        %v890 = vmul.f32 %v858, 0.2
        %v891 = vmul.f32 %v859, 0.2
        %v892 = vmul.f32 %v860, 0.2
        %v893 = vmul.f32 %v861, 0.2
        %v894 = vmul.f32 %v862, 0.2
        %v895 = vmul.f32 %v863, 0.2
        %v896 = vmul.f32 %v864, 0.2
        %v897 = vsel %vm865, %v849, %v881
        %v898 = vsel %vm866, %v850, %v882
        %v899 = vsel %vm867, %v851, %v883
        %v900 = vsel %vm868, %v852, %v884
        %v901 = vsel %vm869, %v853, %v885
        %v902 = vsel %vm870, %v854, %v886
        %v903 = vsel %vm871, %v855, %v887
        %v904 = vsel %vm872, %v856, %v888
        %v905 = vsel %vm873, %v857, %v889
        %v906 = vsel %vm874, %v858, %v890
        %v907 = vsel %vm875, %v859, %v891
        %v908 = vsel %vm876, %v860, %v892
        %v909 = vsel %vm877, %v861, %v893
        %v910 = vsel %vm878, %v862, %v894
        %v911 = vsel %vm879, %v863, %v895
        %v912 = vsel %vm880, %v864, %v896
        %v913 = vld [vmem:[%s409] sm:$0xf]
        %v914 = vld [vmem:[%s409 + $0x4] sm:$0xf]
        %v915 = vld [vmem:[%s409 + $0x8] sm:$0xf]
        %v916 = vld [vmem:[%s409 + $0xc] sm:$0xf]
        %v917 = vld [vmem:[%s409 + $0x10] sm:$0xf]
        %v918 = vld [vmem:[%s409 + $0x14] sm:$0xf]
        %v919 = vld [vmem:[%s409 + $0x18] sm:$0xf]
        %v920 = vld [vmem:[%s409 + $0x1c] sm:$0xf]
        %v921 = vld [vmem:[%s409 + $0x20] sm:$0xf]
        %v922 = vld [vmem:[%s409 + $0x24] sm:$0xf]
        %v923 = vld [vmem:[%s409 + $0x28] sm:$0xf]
        %v924 = vld [vmem:[%s409 + $0x2c] sm:$0xf]
        %v925 = vld [vmem:[%s409 + $0x30] sm:$0xf]
        %v926 = vld [vmem:[%s409 + $0x34] sm:$0xf]
        %v927 = vld [vmem:[%s409 + $0x38] sm:$0xf]
        %v928 = vld [vmem:[%s409 + $0x3c] sm:$0xf]
        %v929 = vunpack.c.l.bf16 %v913
        %v930 = vunpack.c.l.bf16 %v914
        %v931 = vunpack.c.l.bf16 %v915
        %v932 = vunpack.c.l.bf16 %v916
        %v933 = vunpack.c.l.bf16 %v917
        %v934 = vunpack.c.l.bf16 %v918
        %v935 = vunpack.c.l.bf16 %v919
        %v936 = vunpack.c.l.bf16 %v920
        %v937 = vunpack.c.l.bf16 %v921
        %v938 = vunpack.c.l.bf16 %v922
        %v939 = vunpack.c.l.bf16 %v923
        %v940 = vunpack.c.l.bf16 %v924
        %v941 = vunpack.c.l.bf16 %v925
        %v942 = vunpack.c.l.bf16 %v926
        %v943 = vunpack.c.l.bf16 %v927
        %v944 = vunpack.c.l.bf16 %v928
        %v945 = vadd.f32 %v897, %v929
        %v946 = vadd.f32 %v898, %v930
        %v947 = vadd.f32 %v899, %v931
        %v948 = vadd.f32 %v900, %v932
        %v949 = vadd.f32 %v901, %v933
        %v950 = vadd.f32 %v902, %v934
        %v951 = vadd.f32 %v903, %v935
        %v952 = vadd.f32 %v904, %v936
        %v953 = vadd.f32 %v905, %v937
        %v954 = vadd.f32 %v906, %v938
        %v955 = vadd.f32 %v907, %v939
        %v956 = vadd.f32 %v908, %v940
        %v957 = vadd.f32 %v909, %v941
        %v958 = vadd.f32 %v910, %v942
        %v959 = vadd.f32 %v911, %v943
        %v960 = vadd.f32 %v912, %v944
        %961 = vmax.xlane.f32.xlu0 %v945
        %v962 = vpop.xlane.xlu0 %961
        %963 = vmax.xlane.f32.xlu0 %v946
        %v964 = vpop.xlane.xlu0 %963
        %965 = vmax.xlane.f32.xlu0 %v947
        %v966 = vpop.xlane.xlu0 %965
        %967 = vmax.xlane.f32.xlu0 %v948
        %v968 = vpop.xlane.xlu0 %967
        %969 = vmax.xlane.f32.xlu0 %v949
        %v970 = vpop.xlane.xlu0 %969
        %971 = vmax.xlane.f32.xlu0 %v950
        %v972 = vpop.xlane.xlu0 %971
        %973 = vmax.xlane.f32.xlu0 %v951
        %v974 = vpop.xlane.xlu0 %973
        %975 = vmax.xlane.f32.xlu0 %v952
        %v976 = vpop.xlane.xlu0 %975
        %977 = vmax.xlane.f32.xlu0 %v953
        %v978 = vpop.xlane.xlu0 %977
        %979 = vmax.xlane.f32.xlu0 %v954
        %v980 = vpop.xlane.xlu0 %979
        %981 = vmax.xlane.f32.xlu0 %v955
        %v982 = vpop.xlane.xlu0 %981
        %983 = vmax.xlane.f32.xlu0 %v956
        %v984 = vpop.xlane.xlu0 %983
        %985 = vmax.xlane.f32.xlu0 %v957
        %v986 = vpop.xlane.xlu0 %985
        %987 = vmax.xlane.f32.xlu0 %v958
        %v988 = vpop.xlane.xlu0 %987
        %989 = vmax.xlane.f32.xlu0 %v959
        %v990 = vpop.xlane.xlu0 %989
        %991 = vmax.xlane.f32.xlu0 %v960
        %v992 = vpop.xlane.xlu0 %991
        %v993 = vsub.f32 %v945, %v962
        %v994 = vsub.f32 %v946, %v964
        %v995 = vsub.f32 %v947, %v966
        %v996 = vsub.f32 %v948, %v968
        %v997 = vsub.f32 %v949, %v970
        %v998 = vsub.f32 %v950, %v972
        %v999 = vsub.f32 %v951, %v974
        %v1000 = vsub.f32 %v952, %v976
        %v1001 = vsub.f32 %v953, %v978
        %v1002 = vsub.f32 %v954, %v980
        %v1003 = vsub.f32 %v955, %v982
        %v1004 = vsub.f32 %v956, %v984
        %v1005 = vsub.f32 %v957, %v986
        %v1006 = vsub.f32 %v958, %v988
        %v1007 = vsub.f32 %v959, %v990
        %v1008 = vsub.f32 %v960, %v992
        %v1009 = vmul.f32 %v993, 1.442695
        %v1010 = vpow.pop %v1009
        %v1011 = vmul.f32 %v994, 1.442695
        %v1012 = vpow.pop %v1011
        %v1013 = vmul.f32 %v995, 1.442695
        %v1014 = vpow.pop %v1013
        %v1015 = vmul.f32 %v996, 1.442695
        %v1016 = vpow.pop %v1015
        %v1017 = vmul.f32 %v997, 1.442695
        %v1018 = vpow.pop %v1017
        %v1019 = vmul.f32 %v998, 1.442695
        %v1020 = vpow.pop %v1019
        %v1021 = vmul.f32 %v999, 1.442695
        %v1022 = vpow.pop %v1021
        %v1023 = vmul.f32 %v1000, 1.442695
        %v1024 = vpow.pop %v1023
        %v1025 = vmul.f32 %v1001, 1.442695
        %v1026 = vpow.pop %v1025
        %v1027 = vmul.f32 %v1002, 1.442695
        %v1028 = vpow.pop %v1027
        %v1029 = vmul.f32 %v1003, 1.442695
        %v1030 = vpow.pop %v1029
        %v1031 = vmul.f32 %v1004, 1.442695
        %v1032 = vpow.pop %v1031
        %v1033 = vmul.f32 %v1005, 1.442695
        %v1034 = vpow.pop %v1033
        %v1035 = vmul.f32 %v1006, 1.442695
        %v1036 = vpow.pop %v1035
        %v1037 = vmul.f32 %v1007, 1.442695
        %v1038 = vpow.pop %v1037
        %v1039 = vmul.f32 %v1008, 1.442695
        %v1040 = vpow.pop %v1039
        %1041 = vadd.xlane.f32.xlu0 %v1010
        %v1042 = vpop.xlane.xlu0 %1041
        %1043 = vadd.xlane.f32.xlu0 %v1012
        %v1044 = vpop.xlane.xlu0 %1043
        %1045 = vadd.xlane.f32.xlu0 %v1014
        %v1046 = vpop.xlane.xlu0 %1045
        %1047 = vadd.xlane.f32.xlu0 %v1016
        %v1048 = vpop.xlane.xlu0 %1047
        %1049 = vadd.xlane.f32.xlu0 %v1018
        %v1050 = vpop.xlane.xlu0 %1049
        %1051 = vadd.xlane.f32.xlu0 %v1020
        %v1052 = vpop.xlane.xlu0 %1051
        %1053 = vadd.xlane.f32.xlu0 %v1022
        %v1054 = vpop.xlane.xlu0 %1053
        %1055 = vadd.xlane.f32.xlu0 %v1024
        %v1056 = vpop.xlane.xlu0 %1055
        %1057 = vadd.xlane.f32.xlu0 %v1026
        %v1058 = vpop.xlane.xlu0 %1057
        %1059 = vadd.xlane.f32.xlu0 %v1028
        %v1060 = vpop.xlane.xlu0 %1059
        %1061 = vadd.xlane.f32.xlu0 %v1030
        %v1062 = vpop.xlane.xlu0 %1061
        %1063 = vadd.xlane.f32.xlu0 %v1032
        %v1064 = vpop.xlane.xlu0 %1063
        %1065 = vadd.xlane.f32.xlu0 %v1034
        %v1066 = vpop.xlane.xlu0 %1065
        %1067 = vadd.xlane.f32.xlu0 %v1036
        %v1068 = vpop.xlane.xlu0 %1067
        %1069 = vadd.xlane.f32.xlu0 %v1038
        %v1070 = vpop.xlane.xlu0 %1069
        %1071 = vadd.xlane.f32.xlu0 %v1040
        %v1072 = vpop.xlane.xlu0 %1071
        %v1073 = vrcp.pop %v1042
        %v1074 = vmul.f32 %v1010, %v1073
        %v1075 = vrcp.pop %v1044
        %v1076 = vmul.f32 %v1012, %v1075
        %v1077 = vrcp.pop %v1046
        %v1078 = vmul.f32 %v1014, %v1077
        %v1079 = vrcp.pop %v1048
        %v1080 = vmul.f32 %v1016, %v1079
        %v1081 = vrcp.pop %v1050
        %v1082 = vmul.f32 %v1018, %v1081
        %v1083 = vrcp.pop %v1052
        %v1084 = vmul.f32 %v1020, %v1083
        %v1085 = vrcp.pop %v1054
        %v1086 = vmul.f32 %v1022, %v1085
        %v1087 = vrcp.pop %v1056
        %v1088 = vmul.f32 %v1024, %v1087
        %v1089 = vrcp.pop %v1058
        %v1090 = vmul.f32 %v1026, %v1089
        %v1091 = vrcp.pop %v1060
        %v1092 = vmul.f32 %v1028, %v1091
        %v1093 = vrcp.pop %v1062
        %v1094 = vmul.f32 %v1030, %v1093
        %v1095 = vrcp.pop %v1064
        %v1096 = vmul.f32 %v1032, %v1095
        %v1097 = vrcp.pop %v1066
        %v1098 = vmul.f32 %v1034, %v1097
        %v1099 = vrcp.pop %v1068
        %v1100 = vmul.f32 %v1036, %v1099
        %v1101 = vrcp.pop %v1070
        %v1102 = vmul.f32 %v1038, %v1101
        %v1103 = vrcp.pop %v1072
        %v1104 = vmul.f32 %v1040, %v1103
        %v1105 = vpack.c.bf16 %v1076, %v1074
        %v1106 = vpack.c.bf16 %v1080, %v1078
        %v1107 = vpack.c.bf16 %v1084, %v1082
        %v1108 = vpack.c.bf16 %v1088, %v1086
        %v1109 = vpack.c.bf16 %v1092, %v1090
        %v1110 = vpack.c.bf16 %v1096, %v1094
        %v1111 = vpack.c.bf16 %v1100, %v1098
        %v1112 = vpack.c.bf16 %v1104, %v1102
        %v1113 = vpack.c.bf16 %v664, %v661
        %v1114 = vpack.c.bf16 %v672, %v669
        %v1115 = vpack.c.bf16 %v680, %v677
        %v1116 = vpack.c.bf16 %v688, %v685
        %v1117 = vpack.c.bf16 %v696, %v693
        %v1118 = vpack.c.bf16 %v704, %v701
        %v1119 = vpack.c.bf16 %v712, %v709
        %v1120 = vpack.c.bf16 %v720, %v717
        %v1121 = vlaneseq
        %v1122 = vshrl.u32 %v1121, 7
        %v1123 = vsub.s32 0, %v1122
        %v1124 = vrot.slane %v511, %v1123
        %1125 = vmatprep.subr.bf16.mxu0 0
        %1126 = vmatpush1.bf16.msra.mxu0 %v1120
        %1127 = vmatprep.subr.bf16.mxu0 0
        %1128 = vmatpush1.bf16.msra.mxu0 %v1119
        %1129 = vmatprep.subr.bf16.mxu0 0
        %1130 = vmatpush1.bf16.msra.mxu0 %v1118
        %1131 = vmatprep.subr.bf16.mxu0 0
        %1132 = vmatpush1.bf16.msra.mxu0 %v1117
        %1133 = vmatprep.subr.bf16.mxu0 0
        %1134 = vmatpush1.bf16.msra.mxu0 %v1116
        %1135 = vmatprep.subr.bf16.mxu0 0
        %1136 = vmatpush1.bf16.msra.mxu0 %v1115
        %1137 = vmatprep.subr.bf16.mxu0 0
        %1138 = vmatpush1.bf16.msra.mxu0 %v1114
        %1139 = vmatprep.subr.bf16.mxu0 0
        %1140 = vmatpush1.bf16.msra.mxu0 %v1113
        %1141 = vmatprep.subr.bf16.mxu0 0
        %1142 = vmatpush2.bf16.msra.mxu0 0
        %1143 = vmatprep.subr.bf16.mxu0 0
        %1144 = vmatpush2.bf16.msra.mxu0 0
        %1145 = vmatprep.subr.bf16.mxu0 0
        %1146 = vmatpush2.bf16.msra.mxu0 0
        %1147 = vmatprep.subr.bf16.mxu0 0
        %1148 = vmatpush2.bf16.msra.mxu0 0
        %1149 = vmatprep.subr.bf16.mxu0 0
        %1150 = vmatpush2.bf16.msra.mxu0 0
        %1151 = vmatprep.subr.bf16.mxu0 0
        %1152 = vmatpush2.bf16.msra.mxu0 0
        %1153 = vmatprep.subr.bf16.mxu0 0
        %1154 = vmatpush2.bf16.msra.mxu0 0
        %1155 = vmatprep.subr.bf16.mxu0 0
        %1156 = vmatpush2.bf16.msra.mxu0 0
        %1157 = vmatprep.mubr.bf16.mxu0 0
        %1158 = vmatmul.mubr.bf16.gmra.mxu0 %v1105
        %v1159 = vpop.f32.mrf.mxu0
        %v1160 = vadd.f32 %v1124, %v1159
        %v1161 = vpop.f32.mrf.mxu0
        %v1162 = vpop.f32.mrf.mxu0
        %v1163 = vadd.f32 %v1124, %v1162
        %v1164 = vpop.f32.mrf.mxu0
        %1165 = vmatprep.mubr.bf16.mxu0 0
        %1166 = vmatmul.mubr.bf16.gmra.mxu0 %v1106
        %v1167 = vpop.f32.mrf.mxu0
        %v1168 = vadd.f32 %v1124, %v1167
        %v1169 = vpop.f32.mrf.mxu0
        %v1170 = vpop.f32.mrf.mxu0
        %v1171 = vadd.f32 %v1124, %v1170
        %v1172 = vpop.f32.mrf.mxu0
        %1173 = vmatprep.mubr.bf16.mxu0 0
        %1174 = vmatmul.mubr.bf16.gmra.mxu0 %v1107
        %v1175 = vpop.f32.mrf.mxu0
        %v1176 = vadd.f32 %v1124, %v1175
        %v1177 = vpop.f32.mrf.mxu0
        %v1178 = vpop.f32.mrf.mxu0
        %v1179 = vadd.f32 %v1124, %v1178
        %v1180 = vpop.f32.mrf.mxu0
        %1181 = vmatprep.mubr.bf16.mxu0 0
        %1182 = vmatmul.mubr.bf16.gmra.mxu0 %v1108
        %v1183 = vpop.f32.mrf.mxu0
        %v1184 = vadd.f32 %v1124, %v1183
        %v1185 = vpop.f32.mrf.mxu0
        %v1186 = vpop.f32.mrf.mxu0
        %v1187 = vadd.f32 %v1124, %v1186
        %v1188 = vpop.f32.mrf.mxu0
        %1189 = vmatprep.mubr.bf16.mxu0 0
        %1190 = vmatmul.mubr.bf16.gmra.mxu0 %v1109
        %v1191 = vpop.f32.mrf.mxu0
        %v1192 = vadd.f32 %v1124, %v1191
        %v1193 = vpop.f32.mrf.mxu0
        %v1194 = vpop.f32.mrf.mxu0
        %v1195 = vadd.f32 %v1124, %v1194
        %v1196 = vpop.f32.mrf.mxu0
        %1197 = vmatprep.mubr.bf16.mxu0 0
        %1198 = vmatmul.mubr.bf16.gmra.mxu0 %v1110
        %v1199 = vpop.f32.mrf.mxu0
        %v1200 = vadd.f32 %v1124, %v1199
        %v1201 = vpop.f32.mrf.mxu0
        %v1202 = vpop.f32.mrf.mxu0
        %v1203 = vadd.f32 %v1124, %v1202
        %v1204 = vpop.f32.mrf.mxu0
        %1205 = vmatprep.mubr.bf16.mxu0 0
        %1206 = vmatmul.mubr.bf16.gmra.mxu0 %v1111
        %v1207 = vpop.f32.mrf.mxu0
        %v1208 = vadd.f32 %v1124, %v1207
        %v1209 = vpop.f32.mrf.mxu0
        %v1210 = vpop.f32.mrf.mxu0
        %v1211 = vadd.f32 %v1124, %v1210
        %v1212 = vpop.f32.mrf.mxu0
        %1213 = vmatprep.mubr.bf16.mxu0 0
        %1214 = vmatmul.mubr.bf16.gmra.mxu0 %v1112
        %v1215 = vpop.f32.mrf.mxu0
        %v1216 = vadd.f32 %v1124, %v1215
        %v1217 = vpop.f32.mrf.mxu0
        %v1218 = vpop.f32.mrf.mxu0
        %v1219 = vadd.f32 %v1124, %v1218
        %v1220 = vpop.f32.mrf.mxu0
        %1221 = vdwg.mxu0
        %v1222 = vmax.f32 %v1160, 0.0
        %v1223 = vmax.f32 %v1163, 0.0
        %v1224 = vmax.f32 %v1168, 0.0
        %v1225 = vmax.f32 %v1171, 0.0
        %v1226 = vmax.f32 %v1176, 0.0
        %v1227 = vmax.f32 %v1179, 0.0
        %v1228 = vmax.f32 %v1184, 0.0
        %v1229 = vmax.f32 %v1187, 0.0
        %v1230 = vmax.f32 %v1192, 0.0
        %v1231 = vmax.f32 %v1195, 0.0
        %v1232 = vmax.f32 %v1200, 0.0
        %v1233 = vmax.f32 %v1203, 0.0
        %v1234 = vmax.f32 %v1208, 0.0
        %v1235 = vmax.f32 %v1211, 0.0
        %v1236 = vmax.f32 %v1216, 0.0
        %v1237 = vmax.f32 %v1219, 0.0
        %v1238 = vpack.c.bf16 %v1223, %v1222
        %v1239 = vpack.c.bf16 %v1225, %v1224
        %v1240 = vpack.c.bf16 %v1227, %v1226
        %v1241 = vpack.c.bf16 %v1229, %v1228
        %v1242 = vpack.c.bf16 %v1231, %v1230
        %v1243 = vpack.c.bf16 %v1233, %v1232
        %v1244 = vpack.c.bf16 %v1235, %v1234
        %v1245 = vpack.c.bf16 %v1237, %v1236
        %v1246 = vld [vmem:[#allocation13 + $0x3] sm:$0x1]
        %v1247 = vld [vmem:[#allocation13 + $0x4] sm:$0x1]
        %v1248 = vld [vmem:[#allocation13 + $0x5] sm:$0x1]
        %v1249 = vld [vmem:[#allocation10] sm:$0xf]
        %v1250 = vld [vmem:[#allocation10 + $0x4] sm:$0xf]
        %v1251 = vld [vmem:[#allocation10 + $0x8] sm:$0xf]
        %v1252 = vld [vmem:[#allocation10 + $0xc] sm:$0xf]
        %v1253 = vld [vmem:[#allocation10 + $0x10] sm:$0xf]
        %v1254 = vld [vmem:[#allocation10 + $0x14] sm:$0xf]
        %v1255 = vld [vmem:[#allocation10 + $0x18] sm:$0xf]
        %v1256 = vld [vmem:[#allocation10 + $0x1c] sm:$0xf]
        %v1257 = vld [vmem:[#allocation10 + $0x20] sm:$0xf]
        %v1258 = vld [vmem:[#allocation10 + $0x24] sm:$0xf]
        %v1259 = vld [vmem:[#allocation10 + $0x28] sm:$0xf]
        %v1260 = vld [vmem:[#allocation10 + $0x2c] sm:$0xf]
        %v1261 = vld [vmem:[#allocation10 + $0x30] sm:$0xf]
        %v1262 = vld [vmem:[#allocation10 + $0x34] sm:$0xf]
        %v1263 = vld [vmem:[#allocation10 + $0x38] sm:$0xf]
        %v1264 = vld [vmem:[#allocation10 + $0x3c] sm:$0xf]
        %v1281 = vunpack.c.l.b16 %v1249
        %v1282 = vunpack.c.l.b16 %v1250
        %v1283 = vunpack.c.l.b16 %v1251
        %v1284 = vunpack.c.l.b16 %v1252
        %v1285 = vunpack.c.l.b16 %v1253
        %v1286 = vunpack.c.l.b16 %v1254
        %v1287 = vunpack.c.l.b16 %v1255
        %v1288 = vunpack.c.l.b16 %v1256
        %v1289 = vunpack.c.l.b16 %v1257
        %v1290 = vunpack.c.l.b16 %v1258
        %v1291 = vunpack.c.l.b16 %v1259
        %v1292 = vunpack.c.l.b16 %v1260
        %v1293 = vunpack.c.l.b16 %v1261
        %v1294 = vunpack.c.l.b16 %v1262
        %v1295 = vunpack.c.l.b16 %v1263
        %v1296 = vunpack.c.l.b16 %v1264
        %v1297 = vpack.c.b16 %v1282, %v1281
        %v1298 = vpack.c.b16 %v1284, %v1283
        %v1299 = vpack.c.b16 %v1286, %v1285
        %v1300 = vpack.c.b16 %v1288, %v1287
        %v1301 = vpack.c.b16 %v1290, %v1289
        %v1302 = vpack.c.b16 %v1292, %v1291
        %v1303 = vpack.c.b16 %v1294, %v1293
        %v1304 = vpack.c.b16 %v1296, %v1295
        %1313 = vmatprep.subr.bf16.mxu0 0
        %1314 = vmatpush1.bf16.msra.mxu0 %v1304
        %1315 = vmatprep.subr.bf16.mxu0 0
        %1316 = vmatpush1.bf16.msra.mxu0 %v1303
        %1317 = vmatprep.subr.bf16.mxu0 0
        %1318 = vmatpush1.bf16.msra.mxu0 %v1302
        %1319 = vmatprep.subr.bf16.mxu0 0
        %1320 = vmatpush1.bf16.msra.mxu0 %v1301
        %1321 = vmatprep.subr.bf16.mxu0 0
        %1322 = vmatpush1.bf16.msra.mxu0 %v1300
        %1323 = vmatprep.subr.bf16.mxu0 0
        %1324 = vmatpush1.bf16.msra.mxu0 %v1299
        %1325 = vmatprep.subr.bf16.mxu0 0
        %1326 = vmatpush1.bf16.msra.mxu0 %v1298
        %1327 = vmatprep.subr.bf16.mxu0 0
        %1328 = vmatpush1.bf16.msra.mxu0 %v1297
        %1329 = vmatprep.subr.bf16.mxu0 0
        %1330 = vmatpush2.bf16.msra.mxu0 0
        %1331 = vmatprep.subr.bf16.mxu0 0
        %1332 = vmatpush2.bf16.msra.mxu0 0
        %1333 = vmatprep.subr.bf16.mxu0 0
        %1334 = vmatpush2.bf16.msra.mxu0 0
        %1335 = vmatprep.subr.bf16.mxu0 0
        %1336 = vmatpush2.bf16.msra.mxu0 0
        %1337 = vmatprep.subr.bf16.mxu0 0
        %1338 = vmatpush2.bf16.msra.mxu0 0
        %1339 = vmatprep.subr.bf16.mxu0 0
        %1340 = vmatpush2.bf16.msra.mxu0 0
        %1341 = vmatprep.subr.bf16.mxu0 0
        %1342 = vmatpush2.bf16.msra.mxu0 0
        %1343 = vmatprep.subr.bf16.mxu0 0
        %1344 = vmatpush2.bf16.msra.mxu0 0
        %1345 = vmatprep.mubr.bf16.mxu0 0
        %1346 = vmatmul.mubr.bf16.gmra.mxu0 %v1238
        %v1347 = vpop.f32.mrf.mxu0
        %v1348 = vadd.f32 0.0, %v1347
        %v1349 = vpop.f32.mrf.mxu0
        %v1350 = vpop.f32.mrf.mxu0
        %v1351 = vadd.f32 0.0, %v1350
        %v1352 = vpop.f32.mrf.mxu0
        %1353 = vmatprep.mubr.bf16.mxu0 0
        %1354 = vmatmul.mubr.bf16.gmra.mxu0 %v1239
        %v1355 = vpop.f32.mrf.mxu0
        %v1356 = vadd.f32 0.0, %v1355
        %v1357 = vpop.f32.mrf.mxu0
        %v1358 = vpop.f32.mrf.mxu0
        %v1359 = vadd.f32 0.0, %v1358
        %v1360 = vpop.f32.mrf.mxu0
        %1361 = vmatprep.mubr.bf16.mxu0 0
        %1362 = vmatmul.mubr.bf16.gmra.mxu0 %v1240
        %v1363 = vpop.f32.mrf.mxu0
        %v1364 = vadd.f32 0.0, %v1363
        %v1365 = vpop.f32.mrf.mxu0
        %v1366 = vpop.f32.mrf.mxu0
        %v1367 = vadd.f32 0.0, %v1366
        %v1368 = vpop.f32.mrf.mxu0
        %1369 = vmatprep.mubr.bf16.mxu0 0
        %1370 = vmatmul.mubr.bf16.gmra.mxu0 %v1241
        %v1371 = vpop.f32.mrf.mxu0
        %v1372 = vadd.f32 0.0, %v1371
        %v1373 = vpop.f32.mrf.mxu0
        %v1374 = vpop.f32.mrf.mxu0
        %v1375 = vadd.f32 0.0, %v1374
        %v1376 = vpop.f32.mrf.mxu0
        %1377 = vmatprep.mubr.bf16.mxu0 0
        %1378 = vmatmul.mubr.bf16.gmra.mxu0 %v1242
        %v1379 = vpop.f32.mrf.mxu0
        %v1380 = vadd.f32 0.0, %v1379
        %v1381 = vpop.f32.mrf.mxu0
        %v1382 = vpop.f32.mrf.mxu0
        %v1383 = vadd.f32 0.0, %v1382
        %v1384 = vpop.f32.mrf.mxu0
        %1385 = vmatprep.mubr.bf16.mxu0 0
        %1386 = vmatmul.mubr.bf16.gmra.mxu0 %v1243
        %v1387 = vpop.f32.mrf.mxu0
        %v1388 = vadd.f32 0.0, %v1387
        %v1389 = vpop.f32.mrf.mxu0
        %v1390 = vpop.f32.mrf.mxu0
        %v1391 = vadd.f32 0.0, %v1390
        %v1392 = vpop.f32.mrf.mxu0
        %1393 = vmatprep.mubr.bf16.mxu0 0
        %1394 = vmatmul.mubr.bf16.gmra.mxu0 %v1244
        %v1395 = vpop.f32.mrf.mxu0
        %v1396 = vadd.f32 0.0, %v1395
        %v1397 = vpop.f32.mrf.mxu0
        %v1398 = vpop.f32.mrf.mxu0
        %v1399 = vadd.f32 0.0, %v1398
        %v1400 = vpop.f32.mrf.mxu0
        %1401 = vmatprep.mubr.bf16.mxu0 0
        %1402 = vmatmul.mubr.bf16.gmra.mxu0 %v1245
        %v1403 = vpop.f32.mrf.mxu0
        %v1404 = vadd.f32 0.0, %v1403
        %v1405 = vpop.f32.mrf.mxu0
        %v1406 = vpop.f32.mrf.mxu0
        %v1407 = vadd.f32 0.0, %v1406
        %v1408 = vpop.f32.mrf.mxu0
        %1409 = vdwg.mxu0
        %v1410 = vlaneseq
        %v1411 = vshrl.u32 %v1410, 7
        %v1412 = vsub.s32 0, %v1411
        %v1413 = vrot.slane %v1248, %v1412
        %v1414 = vmul.f32 %v1348, %v1413
        %v1415 = vmul.f32 %v1351, %v1413
        %v1416 = vmul.f32 %v1356, %v1413
        %v1417 = vmul.f32 %v1359, %v1413
        %v1418 = vmul.f32 %v1364, %v1413
        %v1419 = vmul.f32 %v1367, %v1413
        %v1420 = vmul.f32 %v1372, %v1413
        %v1421 = vmul.f32 %v1375, %v1413
        %v1422 = vmul.f32 %v1380, %v1413
        %v1423 = vmul.f32 %v1383, %v1413
        %v1424 = vmul.f32 %v1388, %v1413
        %v1425 = vmul.f32 %v1391, %v1413
        %v1426 = vmul.f32 %v1396, %v1413
        %v1427 = vmul.f32 %v1399, %v1413
        %v1428 = vmul.f32 %v1404, %v1413
        %v1429 = vmul.f32 %v1407, %v1413
        %1430 = vadd.xlane.f32.xlu0 %v1414
        %v1431 = vpop.xlane.xlu0 %1430
        %1432 = vadd.xlane.f32.xlu0 %v1415
        %v1433 = vpop.xlane.xlu0 %1432
        %1434 = vadd.xlane.f32.xlu0 %v1416
        %v1435 = vpop.xlane.xlu0 %1434
        %1436 = vadd.xlane.f32.xlu0 %v1417
        %v1437 = vpop.xlane.xlu0 %1436
        %1438 = vadd.xlane.f32.xlu0 %v1418
        %v1439 = vpop.xlane.xlu0 %1438
        %1440 = vadd.xlane.f32.xlu0 %v1419
        %v1441 = vpop.xlane.xlu0 %1440
        %1442 = vadd.xlane.f32.xlu0 %v1420
        %v1443 = vpop.xlane.xlu0 %1442
        %1444 = vadd.xlane.f32.xlu0 %v1421
        %v1445 = vpop.xlane.xlu0 %1444
        %1446 = vadd.xlane.f32.xlu0 %v1422
        %v1447 = vpop.xlane.xlu0 %1446
        %1448 = vadd.xlane.f32.xlu0 %v1423
        %v1449 = vpop.xlane.xlu0 %1448
        %1450 = vadd.xlane.f32.xlu0 %v1424
        %v1451 = vpop.xlane.xlu0 %1450
        %1452 = vadd.xlane.f32.xlu0 %v1425
        %v1453 = vpop.xlane.xlu0 %1452
        %1454 = vadd.xlane.f32.xlu0 %v1426
        %v1455 = vpop.xlane.xlu0 %1454
        %1456 = vadd.xlane.f32.xlu0 %v1427
        %v1457 = vpop.xlane.xlu0 %1456
        %1458 = vadd.xlane.f32.xlu0 %v1428
        %v1459 = vpop.xlane.xlu0 %1458
        %1460 = vadd.xlane.f32.xlu0 %v1429
        %v1461 = vpop.xlane.xlu0 %1460
        %1462 = vmatprep.subr.mxu0 0.0
        %1463 = vmatpush1.xpose.msra.mxu0 %v1407
        %1464 = vmatprep.subr.mxu0 0.0
        %1465 = vmatpush1.xpose.msra.mxu0 %v1404
        %1466 = vmatprep.subr.mxu0 0.0
        %1467 = vmatpush1.xpose.msra.mxu0 %v1399
        %1468 = vmatprep.subr.mxu0 0.0
        %1469 = vmatpush1.xpose.msra.mxu0 %v1396
        %1470 = vmatprep.subr.mxu0 0.0
        %1471 = vmatpush1.xpose.msra.mxu0 %v1391
        %1472 = vmatprep.subr.mxu0 0.0
        %1473 = vmatpush1.xpose.msra.mxu0 %v1388
        %1474 = vmatprep.subr.mxu0 0.0
        %1475 = vmatpush1.xpose.msra.mxu0 %v1383
        %1476 = vmatprep.subr.mxu0 0.0
        %1477 = vmatpush1.xpose.msra.mxu0 %v1380
        %1478 = vmatprep.subr.mxu0 0.0
        %1479 = vmatpush1.xpose.msra.mxu0 %v1375
        %1480 = vmatprep.subr.mxu0 0.0
        %1481 = vmatpush1.xpose.msra.mxu0 %v1372
        %1482 = vmatprep.subr.mxu0 0.0
        %1483 = vmatpush1.xpose.msra.mxu0 %v1367
        %1484 = vmatprep.subr.mxu0 0.0
        %1485 = vmatpush1.xpose.msra.mxu0 %v1364
        %1486 = vmatprep.subr.mxu0 0.0
        %1487 = vmatpush1.xpose.msra.mxu0 %v1359
        %1488 = vmatprep.subr.mxu0 0.0
        %1489 = vmatpush1.xpose.msra.mxu0 %v1356
        %1490 = vmatprep.subr.mxu0 0.0
        %1491 = vmatpush1.xpose.msra.mxu0 %v1351
        %1492 = vmatprep.subr.mxu0 0.0
        %1493 = vmatpush1.xpose.msra.mxu0 %v1348
        %1494 = vmatprep.subr.mxu0 0.0
        %1495 = vmatpush2.xpose.msra.mxu0 0.0
        %1496 = vmatprep.subr.mxu0 0.0
        %1497 = vmatpush2.xpose.msra.mxu0 0.0
        %1498 = vmatprep.subr.mxu0 0.0
        %1499 = vmatpush2.xpose.msra.mxu0 0.0
        %1500 = vmatprep.subr.mxu0 0.0
        %1501 = vmatpush2.xpose.msra.mxu0 0.0
        %1502 = vmatprep.subr.mxu0 0.0
        %1503 = vmatpush2.xpose.msra.mxu0 0.0
        %1504 = vmatprep.subr.mxu0 0.0
        %1505 = vmatpush2.xpose.msra.mxu0 0.0
        %1506 = vmatprep.subr.mxu0 0.0
        %1507 = vmatpush2.xpose.msra.mxu0 0.0
        %1508 = vmatprep.subr.mxu0 0.0
        %1509 = vmatpush2.xpose.msra.mxu0 0.0
        %1510 = vmatprep.subr.mxu0 0.0
        %1511 = vmatpush2.xpose.msra.mxu0 0.0
        %1512 = vmatprep.subr.mxu0 0.0
        %1513 = vmatpush2.xpose.msra.mxu0 0.0
        %1514 = vmatprep.subr.mxu0 0.0
        %1515 = vmatpush2.xpose.msra.mxu0 0.0
        %1516 = vmatprep.subr.mxu0 0.0
        %1517 = vmatpush2.xpose.msra.mxu0 0.0
        %1518 = vmatprep.subr.mxu0 0.0
        %1519 = vmatpush2.xpose.msra.mxu0 0.0
        %1520 = vmatprep.subr.mxu0 0.0
        %1521 = vmatpush2.xpose.msra.mxu0 0.0
        %1522 = vmatprep.subr.mxu0 0.0
        %1523 = vmatpush2.xpose.msra.mxu0 0.0
        %1524 = vmatprep.subr.mxu0 0.0
        %1525 = vmatpush2.xpose.msra.mxu0 0.0
        %1526 = vmatprep.mubr.f32.mxu0 0.0
        %1527 = vmatmul.mubr.f32.gmra.mxu0 %v1247
        %v1528 = vpop.f32.mrf.mxu0
        %v1529 = vadd.f32 0.0, %v1528
        %v1530 = vpop.f32.mrf.mxu0
        %1531 = vdwg.mxu0
        %v1532 = vlaneseq
        %v1533 = vshrl.u32 %v1532, 7
        %v1534 = vsub.s32 0, %v1533
        %v1535 = vrot.slane %v1529, %v1534
        %v1536 = vadd.f32 %v1431, %v1535
        %v1537 = vadd.f32 %v1433, %v1535
        %v1538 = vadd.f32 %v1435, %v1535
        %v1539 = vadd.f32 %v1437, %v1535
        %v1540 = vadd.f32 %v1439, %v1535
        %v1541 = vadd.f32 %v1441, %v1535
        %v1542 = vadd.f32 %v1443, %v1535
        %v1543 = vadd.f32 %v1445, %v1535
        %v1544 = vadd.f32 %v1447, %v1535
        %v1545 = vadd.f32 %v1449, %v1535
        %v1546 = vadd.f32 %v1451, %v1535
        %v1547 = vadd.f32 %v1453, %v1535
        %v1548 = vadd.f32 %v1455, %v1535
        %v1549 = vadd.f32 %v1457, %v1535
        %v1550 = vadd.f32 %v1459, %v1535
        %v1551 = vadd.f32 %v1461, %v1535
        %vm1552 = vcmp.gt.f32.partialorder %v1536, 0.0
        %vm1553 = vcmp.gt.f32.partialorder %v1537, 0.0
        %vm1554 = vcmp.gt.f32.partialorder %v1538, 0.0
        %vm1555 = vcmp.gt.f32.partialorder %v1539, 0.0
        %vm1556 = vcmp.gt.f32.partialorder %v1540, 0.0
        %vm1557 = vcmp.gt.f32.partialorder %v1541, 0.0
        %vm1558 = vcmp.gt.f32.partialorder %v1542, 0.0
        %vm1559 = vcmp.gt.f32.partialorder %v1543, 0.0
        %vm1560 = vcmp.gt.f32.partialorder %v1544, 0.0
        %vm1561 = vcmp.gt.f32.partialorder %v1545, 0.0
        %vm1562 = vcmp.gt.f32.partialorder %v1546, 0.0
        %vm1563 = vcmp.gt.f32.partialorder %v1547, 0.0
        %vm1564 = vcmp.gt.f32.partialorder %v1548, 0.0
        %vm1565 = vcmp.gt.f32.partialorder %v1549, 0.0
        %vm1566 = vcmp.gt.f32.partialorder %v1550, 0.0
        %vm1567 = vcmp.gt.f32.partialorder %v1551, 0.0
        %v1568 = vmul.f32 %v1536, 0.2
        %v1569 = vmul.f32 %v1537, 0.2
        %v1570 = vmul.f32 %v1538, 0.2
        %v1571 = vmul.f32 %v1539, 0.2
        %v1572 = vmul.f32 %v1540, 0.2
        %v1573 = vmul.f32 %v1541, 0.2
        %v1574 = vmul.f32 %v1542, 0.2
        %v1575 = vmul.f32 %v1543, 0.2
        %v1576 = vmul.f32 %v1544, 0.2
        %v1577 = vmul.f32 %v1545, 0.2
        %v1578 = vmul.f32 %v1546, 0.2
        %v1579 = vmul.f32 %v1547, 0.2
        %v1580 = vmul.f32 %v1548, 0.2
        %v1581 = vmul.f32 %v1549, 0.2
        %v1582 = vmul.f32 %v1550, 0.2
        %v1583 = vmul.f32 %v1551, 0.2
        %v1584 = vsel %vm1552, %v1536, %v1568
        %v1585 = vsel %vm1553, %v1537, %v1569
        %v1586 = vsel %vm1554, %v1538, %v1570
        %v1587 = vsel %vm1555, %v1539, %v1571
        %v1588 = vsel %vm1556, %v1540, %v1572
        %v1589 = vsel %vm1557, %v1541, %v1573
        %v1590 = vsel %vm1558, %v1542, %v1574
        %v1591 = vsel %vm1559, %v1543, %v1575
        %v1592 = vsel %vm1560, %v1544, %v1576
        %v1593 = vsel %vm1561, %v1545, %v1577
        %v1594 = vsel %vm1562, %v1546, %v1578
        %v1595 = vsel %vm1563, %v1547, %v1579
        %v1596 = vsel %vm1564, %v1548, %v1580
        %v1597 = vsel %vm1565, %v1549, %v1581
        %v1598 = vsel %vm1566, %v1550, %v1582
        %v1599 = vsel %vm1567, %v1551, %v1583
        %v1600 = vld [vmem:[%s418] sm:$0xf]
        %v1601 = vld [vmem:[%s418 + $0x4] sm:$0xf]
        %v1602 = vld [vmem:[%s418 + $0x8] sm:$0xf]
        %v1603 = vld [vmem:[%s418 + $0xc] sm:$0xf]
        %v1604 = vld [vmem:[%s418 + $0x10] sm:$0xf]
        %v1605 = vld [vmem:[%s418 + $0x14] sm:$0xf]
        %v1606 = vld [vmem:[%s418 + $0x18] sm:$0xf]
        %v1607 = vld [vmem:[%s418 + $0x1c] sm:$0xf]
        %v1608 = vld [vmem:[%s418 + $0x20] sm:$0xf]
        %v1609 = vld [vmem:[%s418 + $0x24] sm:$0xf]
        %v1610 = vld [vmem:[%s418 + $0x28] sm:$0xf]
        %v1611 = vld [vmem:[%s418 + $0x2c] sm:$0xf]
        %v1612 = vld [vmem:[%s418 + $0x30] sm:$0xf]
        %v1613 = vld [vmem:[%s418 + $0x34] sm:$0xf]
        %v1614 = vld [vmem:[%s418 + $0x38] sm:$0xf]
        %v1615 = vld [vmem:[%s418 + $0x3c] sm:$0xf]
        %v1616 = vunpack.c.l.bf16 %v1600
        %v1617 = vunpack.c.l.bf16 %v1601
        %v1618 = vunpack.c.l.bf16 %v1602
        %v1619 = vunpack.c.l.bf16 %v1603
        %v1620 = vunpack.c.l.bf16 %v1604
        %v1621 = vunpack.c.l.bf16 %v1605
        %v1622 = vunpack.c.l.bf16 %v1606
        %v1623 = vunpack.c.l.bf16 %v1607
        %v1624 = vunpack.c.l.bf16 %v1608
        %v1625 = vunpack.c.l.bf16 %v1609
        %v1626 = vunpack.c.l.bf16 %v1610
        %v1627 = vunpack.c.l.bf16 %v1611
        %v1628 = vunpack.c.l.bf16 %v1612
        %v1629 = vunpack.c.l.bf16 %v1613
        %v1630 = vunpack.c.l.bf16 %v1614
        %v1631 = vunpack.c.l.bf16 %v1615
        %v1632 = vadd.f32 %v1584, %v1616
        %v1633 = vadd.f32 %v1585, %v1617
        %v1634 = vadd.f32 %v1586, %v1618
        %v1635 = vadd.f32 %v1587, %v1619
        %v1636 = vadd.f32 %v1588, %v1620
        %v1637 = vadd.f32 %v1589, %v1621
        %v1638 = vadd.f32 %v1590, %v1622
        %v1639 = vadd.f32 %v1591, %v1623
        %v1640 = vadd.f32 %v1592, %v1624
        %v1641 = vadd.f32 %v1593, %v1625
        %v1642 = vadd.f32 %v1594, %v1626
        %v1643 = vadd.f32 %v1595, %v1627
        %v1644 = vadd.f32 %v1596, %v1628
        %v1645 = vadd.f32 %v1597, %v1629
        %v1646 = vadd.f32 %v1598, %v1630
        %v1647 = vadd.f32 %v1599, %v1631
        %1648 = vmax.xlane.f32.xlu0 %v1632
        %v1649 = vpop.xlane.xlu0 %1648
        %1650 = vmax.xlane.f32.xlu0 %v1633
        %v1651 = vpop.xlane.xlu0 %1650
        %1652 = vmax.xlane.f32.xlu0 %v1634
        %v1653 = vpop.xlane.xlu0 %1652
        %1654 = vmax.xlane.f32.xlu0 %v1635
        %v1655 = vpop.xlane.xlu0 %1654
        %1656 = vmax.xlane.f32.xlu0 %v1636
        %v1657 = vpop.xlane.xlu0 %1656
        %1658 = vmax.xlane.f32.xlu0 %v1637
        %v1659 = vpop.xlane.xlu0 %1658
        %1660 = vmax.xlane.f32.xlu0 %v1638
        %v1661 = vpop.xlane.xlu0 %1660
        %1662 = vmax.xlane.f32.xlu0 %v1639
        %v1663 = vpop.xlane.xlu0 %1662
        %1664 = vmax.xlane.f32.xlu0 %v1640
        %v1665 = vpop.xlane.xlu0 %1664
        %1666 = vmax.xlane.f32.xlu0 %v1641
        %v1667 = vpop.xlane.xlu0 %1666
        %1668 = vmax.xlane.f32.xlu0 %v1642
        %v1669 = vpop.xlane.xlu0 %1668
        %1670 = vmax.xlane.f32.xlu0 %v1643
        %v1671 = vpop.xlane.xlu0 %1670
        %1672 = vmax.xlane.f32.xlu0 %v1644
        %v1673 = vpop.xlane.xlu0 %1672
        %1674 = vmax.xlane.f32.xlu0 %v1645
        %v1675 = vpop.xlane.xlu0 %1674
        %1676 = vmax.xlane.f32.xlu0 %v1646
        %v1677 = vpop.xlane.xlu0 %1676
        %1678 = vmax.xlane.f32.xlu0 %v1647
        %v1679 = vpop.xlane.xlu0 %1678
        %v1680 = vsub.f32 %v1632, %v1649
        %v1681 = vsub.f32 %v1633, %v1651
        %v1682 = vsub.f32 %v1634, %v1653
        %v1683 = vsub.f32 %v1635, %v1655
        %v1684 = vsub.f32 %v1636, %v1657
        %v1685 = vsub.f32 %v1637, %v1659
        %v1686 = vsub.f32 %v1638, %v1661
        %v1687 = vsub.f32 %v1639, %v1663
        %v1688 = vsub.f32 %v1640, %v1665
        %v1689 = vsub.f32 %v1641, %v1667
        %v1690 = vsub.f32 %v1642, %v1669
        %v1691 = vsub.f32 %v1643, %v1671
        %v1692 = vsub.f32 %v1644, %v1673
        %v1693 = vsub.f32 %v1645, %v1675
        %v1694 = vsub.f32 %v1646, %v1677
        %v1695 = vsub.f32 %v1647, %v1679
        %v1696 = vmul.f32 %v1680, 1.442695
        %v1697 = vpow.pop %v1696
        %v1698 = vmul.f32 %v1681, 1.442695
        %v1699 = vpow.pop %v1698
        %v1700 = vmul.f32 %v1682, 1.442695
        %v1701 = vpow.pop %v1700
        %v1702 = vmul.f32 %v1683, 1.442695
        %v1703 = vpow.pop %v1702
        %v1704 = vmul.f32 %v1684, 1.442695
        %v1705 = vpow.pop %v1704
        %v1706 = vmul.f32 %v1685, 1.442695
        %v1707 = vpow.pop %v1706
        %v1708 = vmul.f32 %v1686, 1.442695
        %v1709 = vpow.pop %v1708
        %v1710 = vmul.f32 %v1687, 1.442695
        %v1711 = vpow.pop %v1710
        %v1712 = vmul.f32 %v1688, 1.442695
        %v1713 = vpow.pop %v1712
        %v1714 = vmul.f32 %v1689, 1.442695
        %v1715 = vpow.pop %v1714
        %v1716 = vmul.f32 %v1690, 1.442695
        %v1717 = vpow.pop %v1716
        %v1718 = vmul.f32 %v1691, 1.442695
        %v1719 = vpow.pop %v1718
        %v1720 = vmul.f32 %v1692, 1.442695
        %v1721 = vpow.pop %v1720
        %v1722 = vmul.f32 %v1693, 1.442695
        %v1723 = vpow.pop %v1722
        %v1724 = vmul.f32 %v1694, 1.442695
        %v1725 = vpow.pop %v1724
        %v1726 = vmul.f32 %v1695, 1.442695
        %v1727 = vpow.pop %v1726
        %1728 = vadd.xlane.f32.xlu0 %v1697
        %v1729 = vpop.xlane.xlu0 %1728
        %1730 = vadd.xlane.f32.xlu0 %v1699
        %v1731 = vpop.xlane.xlu0 %1730
        %1732 = vadd.xlane.f32.xlu0 %v1701
        %v1733 = vpop.xlane.xlu0 %1732
        %1734 = vadd.xlane.f32.xlu0 %v1703
        %v1735 = vpop.xlane.xlu0 %1734
        %1736 = vadd.xlane.f32.xlu0 %v1705
        %v1737 = vpop.xlane.xlu0 %1736
        %1738 = vadd.xlane.f32.xlu0 %v1707
        %v1739 = vpop.xlane.xlu0 %1738
        %1740 = vadd.xlane.f32.xlu0 %v1709
        %v1741 = vpop.xlane.xlu0 %1740
        %1742 = vadd.xlane.f32.xlu0 %v1711
        %v1743 = vpop.xlane.xlu0 %1742
        %1744 = vadd.xlane.f32.xlu0 %v1713
        %v1745 = vpop.xlane.xlu0 %1744
        %1746 = vadd.xlane.f32.xlu0 %v1715
        %v1747 = vpop.xlane.xlu0 %1746
        %1748 = vadd.xlane.f32.xlu0 %v1717
        %v1749 = vpop.xlane.xlu0 %1748
        %1750 = vadd.xlane.f32.xlu0 %v1719
        %v1751 = vpop.xlane.xlu0 %1750
        %1752 = vadd.xlane.f32.xlu0 %v1721
        %v1753 = vpop.xlane.xlu0 %1752
        %1754 = vadd.xlane.f32.xlu0 %v1723
        %v1755 = vpop.xlane.xlu0 %1754
        %1756 = vadd.xlane.f32.xlu0 %v1725
        %v1757 = vpop.xlane.xlu0 %1756
        %1758 = vadd.xlane.f32.xlu0 %v1727
        %v1759 = vpop.xlane.xlu0 %1758
        %v1760 = vrcp.pop %v1729
        %v1761 = vmul.f32 %v1697, %v1760
        %v1762 = vrcp.pop %v1731
        %v1763 = vmul.f32 %v1699, %v1762
        %v1764 = vrcp.pop %v1733
        %v1765 = vmul.f32 %v1701, %v1764
        %v1766 = vrcp.pop %v1735
        %v1767 = vmul.f32 %v1703, %v1766
        %v1768 = vrcp.pop %v1737
        %v1769 = vmul.f32 %v1705, %v1768
        %v1770 = vrcp.pop %v1739
        %v1771 = vmul.f32 %v1707, %v1770
        %v1772 = vrcp.pop %v1741
        %v1773 = vmul.f32 %v1709, %v1772
        %v1774 = vrcp.pop %v1743
        %v1775 = vmul.f32 %v1711, %v1774
        %v1776 = vrcp.pop %v1745
        %v1777 = vmul.f32 %v1713, %v1776
        %v1778 = vrcp.pop %v1747
        %v1779 = vmul.f32 %v1715, %v1778
        %v1780 = vrcp.pop %v1749
        %v1781 = vmul.f32 %v1717, %v1780
        %v1782 = vrcp.pop %v1751
        %v1783 = vmul.f32 %v1719, %v1782
        %v1784 = vrcp.pop %v1753
        %v1785 = vmul.f32 %v1721, %v1784
        %v1786 = vrcp.pop %v1755
        %v1787 = vmul.f32 %v1723, %v1786
        %v1788 = vrcp.pop %v1757
        %v1789 = vmul.f32 %v1725, %v1788
        %v1790 = vrcp.pop %v1759
        %v1791 = vmul.f32 %v1727, %v1790
        %v1792 = vpack.c.bf16 %v1763, %v1761
        %v1793 = vpack.c.bf16 %v1767, %v1765
        %v1794 = vpack.c.bf16 %v1771, %v1769
        %v1795 = vpack.c.bf16 %v1775, %v1773
        %v1796 = vpack.c.bf16 %v1779, %v1777
        %v1797 = vpack.c.bf16 %v1783, %v1781
        %v1798 = vpack.c.bf16 %v1787, %v1785
        %v1799 = vpack.c.bf16 %v1791, %v1789
        %v1800 = vpack.c.bf16 %v1351, %v1348
        %v1801 = vpack.c.bf16 %v1359, %v1356
        %v1802 = vpack.c.bf16 %v1367, %v1364
        %v1803 = vpack.c.bf16 %v1375, %v1372
        %v1804 = vpack.c.bf16 %v1383, %v1380
        %v1805 = vpack.c.bf16 %v1391, %v1388
        %v1806 = vpack.c.bf16 %v1399, %v1396
        %v1807 = vpack.c.bf16 %v1407, %v1404
        %v1808 = vlaneseq
        %v1809 = vshrl.u32 %v1808, 7
        %v1810 = vsub.s32 0, %v1809
        %v1811 = vrot.slane %v1246, %v1810
        %1812 = vmatprep.subr.bf16.mxu0 0
        %1813 = vmatpush1.bf16.msra.mxu0 %v1807
        %1814 = vmatprep.subr.bf16.mxu0 0
        %1815 = vmatpush1.bf16.msra.mxu0 %v1806
        %1816 = vmatprep.subr.bf16.mxu0 0
        %1817 = vmatpush1.bf16.msra.mxu0 %v1805
        %1818 = vmatprep.subr.bf16.mxu0 0
        %1819 = vmatpush1.bf16.msra.mxu0 %v1804
        %1820 = vmatprep.subr.bf16.mxu0 0
        %1821 = vmatpush1.bf16.msra.mxu0 %v1803
        %1822 = vmatprep.subr.bf16.mxu0 0
        %1823 = vmatpush1.bf16.msra.mxu0 %v1802
        %1824 = vmatprep.subr.bf16.mxu0 0
        %1825 = vmatpush1.bf16.msra.mxu0 %v1801
        %1826 = vmatprep.subr.bf16.mxu0 0
        %1827 = vmatpush1.bf16.msra.mxu0 %v1800
        %1828 = vmatprep.subr.bf16.mxu0 0
        %1829 = vmatpush2.bf16.msra.mxu0 0
        %1830 = vmatprep.subr.bf16.mxu0 0
        %1831 = vmatpush2.bf16.msra.mxu0 0
        %1832 = vmatprep.subr.bf16.mxu0 0
        %1833 = vmatpush2.bf16.msra.mxu0 0
        %1834 = vmatprep.subr.bf16.mxu0 0
        %1835 = vmatpush2.bf16.msra.mxu0 0
        %1836 = vmatprep.subr.bf16.mxu0 0
        %1837 = vmatpush2.bf16.msra.mxu0 0
        %1838 = vmatprep.subr.bf16.mxu0 0
        %1839 = vmatpush2.bf16.msra.mxu0 0
        %1840 = vmatprep.subr.bf16.mxu0 0
        %1841 = vmatpush2.bf16.msra.mxu0 0
        %1842 = vmatprep.subr.bf16.mxu0 0
        %1843 = vmatpush2.bf16.msra.mxu0 0
        %1844 = vmatprep.mubr.bf16.mxu0 0
        %1845 = vmatmul.mubr.bf16.gmra.mxu0 %v1792
        %v1846 = vpop.f32.mrf.mxu0
        %v1847 = vadd.f32 %v1811, %v1846
        %v1848 = vpop.f32.mrf.mxu0
        %v1849 = vpop.f32.mrf.mxu0
        %v1850 = vadd.f32 %v1811, %v1849
        %v1851 = vpop.f32.mrf.mxu0
        %1852 = vmatprep.mubr.bf16.mxu0 0
        %1853 = vmatmul.mubr.bf16.gmra.mxu0 %v1793
        %v1854 = vpop.f32.mrf.mxu0
        %v1855 = vadd.f32 %v1811, %v1854
        %v1856 = vpop.f32.mrf.mxu0
        %v1857 = vpop.f32.mrf.mxu0
        %v1858 = vadd.f32 %v1811, %v1857
        %v1859 = vpop.f32.mrf.mxu0
        %1860 = vmatprep.mubr.bf16.mxu0 0
        %1861 = vmatmul.mubr.bf16.gmra.mxu0 %v1794
        %v1862 = vpop.f32.mrf.mxu0
        %v1863 = vadd.f32 %v1811, %v1862
        %v1864 = vpop.f32.mrf.mxu0
        %v1865 = vpop.f32.mrf.mxu0
        %v1866 = vadd.f32 %v1811, %v1865
        %v1867 = vpop.f32.mrf.mxu0
        %1868 = vmatprep.mubr.bf16.mxu0 0
        %1869 = vmatmul.mubr.bf16.gmra.mxu0 %v1795
        %v1870 = vpop.f32.mrf.mxu0
        %v1871 = vadd.f32 %v1811, %v1870
        %v1872 = vpop.f32.mrf.mxu0
        %v1873 = vpop.f32.mrf.mxu0
        %v1874 = vadd.f32 %v1811, %v1873
        %v1875 = vpop.f32.mrf.mxu0
        %1876 = vmatprep.mubr.bf16.mxu0 0
        %1877 = vmatmul.mubr.bf16.gmra.mxu0 %v1796
        %v1878 = vpop.f32.mrf.mxu0
        %v1879 = vadd.f32 %v1811, %v1878
        %v1880 = vpop.f32.mrf.mxu0
        %v1881 = vpop.f32.mrf.mxu0
        %v1882 = vadd.f32 %v1811, %v1881
        %v1883 = vpop.f32.mrf.mxu0
        %1884 = vmatprep.mubr.bf16.mxu0 0
        %1885 = vmatmul.mubr.bf16.gmra.mxu0 %v1797
        %v1886 = vpop.f32.mrf.mxu0
        %v1887 = vadd.f32 %v1811, %v1886
        %v1888 = vpop.f32.mrf.mxu0
        %v1889 = vpop.f32.mrf.mxu0
        %v1890 = vadd.f32 %v1811, %v1889
        %v1891 = vpop.f32.mrf.mxu0
        %1892 = vmatprep.mubr.bf16.mxu0 0
        %1893 = vmatmul.mubr.bf16.gmra.mxu0 %v1798
        %v1894 = vpop.f32.mrf.mxu0
        %v1895 = vadd.f32 %v1811, %v1894
        %v1896 = vpop.f32.mrf.mxu0
        %v1897 = vpop.f32.mrf.mxu0
        %v1898 = vadd.f32 %v1811, %v1897
        %v1899 = vpop.f32.mrf.mxu0
        %1900 = vmatprep.mubr.bf16.mxu0 0
        %1901 = vmatmul.mubr.bf16.gmra.mxu0 %v1799
        %v1902 = vpop.f32.mrf.mxu0
        %v1903 = vadd.f32 %v1811, %v1902
        %v1904 = vpop.f32.mrf.mxu0
        %v1905 = vpop.f32.mrf.mxu0
        %v1906 = vadd.f32 %v1811, %v1905
        %v1907 = vpop.f32.mrf.mxu0
        %1908 = vdwg.mxu0
        %v1909 = vld [vmem:[%s427] sm:$0xff]
        %1910 = vmatprep.subr.mxu0 0.0
        %1911 = vmatpush1.msra.mxu0 %v1906
        %1912 = vmatprep.subr.mxu0 0.0
        %1913 = vmatpush1.msra.mxu0 %v1903
        %1914 = vmatprep.subr.mxu0 0.0
        %1915 = vmatpush1.msra.mxu0 %v1898
        %1916 = vmatprep.subr.mxu0 0.0
        %1917 = vmatpush1.msra.mxu0 %v1895
        %1918 = vmatprep.subr.mxu0 0.0
        %1919 = vmatpush1.msra.mxu0 %v1890
        %1920 = vmatprep.subr.mxu0 0.0
        %1921 = vmatpush1.msra.mxu0 %v1887
        %1922 = vmatprep.subr.mxu0 0.0
        %1923 = vmatpush1.msra.mxu0 %v1882
        %1924 = vmatprep.subr.mxu0 0.0
        %1925 = vmatpush1.msra.mxu0 %v1879
        %1926 = vmatprep.subr.mxu0 0.0
        %1927 = vmatpush1.msra.mxu0 %v1874
        %1928 = vmatprep.subr.mxu0 0.0
        %1929 = vmatpush1.msra.mxu0 %v1871
        %1930 = vmatprep.subr.mxu0 0.0
        %1931 = vmatpush1.msra.mxu0 %v1866
        %1932 = vmatprep.subr.mxu0 0.0
        %1933 = vmatpush1.msra.mxu0 %v1863
        %1934 = vmatprep.subr.mxu0 0.0
        %1935 = vmatpush1.msra.mxu0 %v1858
        %1936 = vmatprep.subr.mxu0 0.0
        %1937 = vmatpush1.msra.mxu0 %v1855
        %1938 = vmatprep.subr.mxu0 0.0
        %1939 = vmatpush1.msra.mxu0 %v1850
        %1940 = vmatprep.subr.mxu0 0.0
        %1941 = vmatpush1.msra.mxu0 %v1847
        %1942 = vmatprep.subr.mxu0 0.0
        %1943 = vmatpush2.msra.mxu0 0.0
        %1944 = vmatprep.subr.mxu0 0.0
        %1945 = vmatpush2.msra.mxu0 0.0
        %1946 = vmatprep.subr.mxu0 0.0
        %1947 = vmatpush2.msra.mxu0 0.0
        %1948 = vmatprep.subr.mxu0 0.0
        %1949 = vmatpush2.msra.mxu0 0.0
        %1950 = vmatprep.subr.mxu0 0.0
        %1951 = vmatpush2.msra.mxu0 0.0
        %1952 = vmatprep.subr.mxu0 0.0
        %1953 = vmatpush2.msra.mxu0 0.0
        %1954 = vmatprep.subr.mxu0 0.0
        %1955 = vmatpush2.msra.mxu0 0.0
        %1956 = vmatprep.subr.mxu0 0.0
        %1957 = vmatpush2.msra.mxu0 0.0
        %1958 = vmatprep.subr.mxu0 0.0
        %1959 = vmatpush2.msra.mxu0 0.0
        %1960 = vmatprep.subr.mxu0 0.0
        %1961 = vmatpush2.msra.mxu0 0.0
        %1962 = vmatprep.subr.mxu0 0.0
        %1963 = vmatpush2.msra.mxu0 0.0
        %1964 = vmatprep.subr.mxu0 0.0
        %1965 = vmatpush2.msra.mxu0 0.0
        %1966 = vmatprep.subr.mxu0 0.0
        %1967 = vmatpush2.msra.mxu0 0.0
        %1968 = vmatprep.subr.mxu0 0.0
        %1969 = vmatpush2.msra.mxu0 0.0
        %1970 = vmatprep.subr.mxu0 0.0
        %1971 = vmatpush2.msra.mxu0 0.0
        %1972 = vmatprep.subr.mxu0 0.0
        %1973 = vmatpush2.msra.mxu0 0.0
        %1974 = vmatprep.mubr.f32.mxu0 0.0
        %1975 = vmatmul.mubr.f32.gmra.mxu0 %v1909
        %v1976 = vpop.f32.mrf.mxu0
        %v1977 = vadd.f32 0.0, %v1976
        %v1978 = vpop.f32.mrf.mxu0
        %1979 = vdwg.mxu0
        %v1980 = vpack.c.bf16 %v1977, %v1977
        %v1981 = vld [vmem:[#allocation12] sm:$0xf]
        %v1982 = vld [vmem:[#allocation12 + $0x4] sm:$0xf]
        %v1983 = vld [vmem:[#allocation12 + $0x8] sm:$0xf]
        %v1984 = vld [vmem:[#allocation12 + $0xc] sm:$0xf]
        %v1985 = vld [vmem:[#allocation12 + $0x10] sm:$0xf]
        %v1986 = vld [vmem:[#allocation12 + $0x14] sm:$0xf]
        %v1987 = vld [vmem:[#allocation12 + $0x18] sm:$0xf]
        %v1988 = vld [vmem:[#allocation12 + $0x1c] sm:$0xf]
        %v1989 = vld [vmem:[#allocation12 + $0x20] sm:$0xf]
        %v1990 = vld [vmem:[#allocation12 + $0x24] sm:$0xf]
        %v1991 = vld [vmem:[#allocation12 + $0x28] sm:$0xf]
        %v1992 = vld [vmem:[#allocation12 + $0x2c] sm:$0xf]
        %v1993 = vld [vmem:[#allocation12 + $0x30] sm:$0xf]
        %v1994 = vld [vmem:[#allocation12 + $0x34] sm:$0xf]
        %v1995 = vld [vmem:[#allocation12 + $0x38] sm:$0xf]
        %v1996 = vld [vmem:[#allocation12 + $0x3c] sm:$0xf]
        %v1997 = vld [vmem:[#allocation13 + $0x6] sm:$0x1]
        %v1998 = vlaneseq
        %v1999 = vshrl.u32 %v1998, 7
        %v2000 = vsub.s32 0, %v1999
        %v2001 = vrot.slane %v1997, %v2000
        %v2018 = vunpack.c.l.b16 %v1981
        %v2019 = vunpack.c.l.b16 %v1982
        %v2020 = vunpack.c.l.b16 %v1983
        %v2021 = vunpack.c.l.b16 %v1984
        %v2022 = vunpack.c.l.b16 %v1985
        %v2023 = vunpack.c.l.b16 %v1986
        %v2024 = vunpack.c.l.b16 %v1987
        %v2025 = vunpack.c.l.b16 %v1988
        %v2026 = vunpack.c.l.b16 %v1989
        %v2027 = vunpack.c.l.b16 %v1990
        %v2028 = vunpack.c.l.b16 %v1991
        %v2029 = vunpack.c.l.b16 %v1992
        %v2030 = vunpack.c.l.b16 %v1993
        %v2031 = vunpack.c.l.b16 %v1994
        %v2032 = vunpack.c.l.b16 %v1995
        %v2033 = vunpack.c.l.b16 %v1996
        %v2034 = vpack.c.b16 %v2019, %v2018
        %v2035 = vpack.c.b16 %v2021, %v2020
        %v2036 = vpack.c.b16 %v2023, %v2022
        %v2037 = vpack.c.b16 %v2025, %v2024
        %v2038 = vpack.c.b16 %v2027, %v2026
        %v2039 = vpack.c.b16 %v2029, %v2028
        %v2040 = vpack.c.b16 %v2031, %v2030
        %v2041 = vpack.c.b16 %v2033, %v2032
        %2050 = vmatprep.subr.bf16.mxu0 0
        %2051 = vmatpush1.bf16.msra.mxu0 %v2041
        %2052 = vmatprep.subr.bf16.mxu0 0
        %2053 = vmatpush1.bf16.msra.mxu0 %v2040
        %2054 = vmatprep.subr.bf16.mxu0 0
        %2055 = vmatpush1.bf16.msra.mxu0 %v2039
        %2056 = vmatprep.subr.bf16.mxu0 0
        %2057 = vmatpush1.bf16.msra.mxu0 %v2038
        %2058 = vmatprep.subr.bf16.mxu0 0
        %2059 = vmatpush1.bf16.msra.mxu0 %v2037
        %2060 = vmatprep.subr.bf16.mxu0 0
        %2061 = vmatpush1.bf16.msra.mxu0 %v2036
        %2062 = vmatprep.subr.bf16.mxu0 0
        %2063 = vmatpush1.bf16.msra.mxu0 %v2035
        %2064 = vmatprep.subr.bf16.mxu0 0
        %2065 = vmatpush1.bf16.msra.mxu0 %v2034
        %2066 = vmatprep.subr.bf16.mxu0 0
        %2067 = vmatpush2.bf16.msra.mxu0 0
        %2068 = vmatprep.subr.bf16.mxu0 0
        %2069 = vmatpush2.bf16.msra.mxu0 0
        %2070 = vmatprep.subr.bf16.mxu0 0
        %2071 = vmatpush2.bf16.msra.mxu0 0
        %2072 = vmatprep.subr.bf16.mxu0 0
        %2073 = vmatpush2.bf16.msra.mxu0 0
        %2074 = vmatprep.subr.bf16.mxu0 0
        %2075 = vmatpush2.bf16.msra.mxu0 0
        %2076 = vmatprep.subr.bf16.mxu0 0
        %2077 = vmatpush2.bf16.msra.mxu0 0
        %2078 = vmatprep.subr.bf16.mxu0 0
        %2079 = vmatpush2.bf16.msra.mxu0 0
        %2080 = vmatprep.subr.bf16.mxu0 0
        %2081 = vmatpush2.bf16.msra.mxu0 0
        %2082 = vmatprep.mubr.bf16.mxu0 0
        %2083 = vmatmul.mubr.bf16.gmra.mxu0 %v1980
        %v2084 = vpop.f32.mrf.mxu0
        %v2085 = vadd.f32 %v2001, %v2084
        %v2086 = vpop.f32.mrf.mxu0
        %v2087 = vpop.f32.mrf.mxu0
        %v2088 = vpop.f32.mrf.mxu0
        %2089 = vdwg.mxu0
        %v2090 = vlaneseq
        %v2091 = vand.u32 %v2090, 127
        %vm2092 = vcmp.lt.s32.totalorder %v2091, 2
        %v2093 = vsel %vm2092, %v2085, -1e+30
        %2094 = vmax.xlane.f32.xlu0 %v2093
        %v2095 = vpop.xlane.xlu0 %2094
        %v2096 = vsub.f32 %v2093, %v2095
        %v2097 = vmul.f32 %v2096, 1.442695
        %v2098 = vpow.pop %v2097
        %2099 = vadd.xlane.f32.xlu0 %v2098
        %v2100 = vpop.xlane.xlu0 %2099
        %v2101 = vlog2.pop %v2100
        %v2102 = vmul.f32 %v2101, 0.6931472
        %v2103 = vsub.f32 %v2096, %v2102
        %v2104 = vsel %vm2092, %v2103, 0.0
        %2105 = vst [vmem:[%s493] sm:$0xff] %v2104
        %p2106 = scmp.lt.s32.totalorder %s30, 3
        %s2107 = scalar_select %p2106, %s30, 3
        %s2108 = smul.addr %s2107, 8
        %s2109 = scalar_lea.vmem %s8, %s2108
        // Predicated region
        $region85: #{trajectory_gat_forward.1} parent=51 // pred_check
          %p2110 = pneg %p236
        $region86: #{trajectory_gat_forward.1} parent=51 // pred_check_branch
          %2112 = sbr.rel (%p2110) target = $region88
        $region87: #{trajectory_gat_forward.1} parent=51 // pred_region
          _
        $region88: #{trajectory_gat_forward.1} parent=51 // pred_fallthru
          _
      $region52: #{trajectory_gat_forward.1} parent=5 // pred_fallthru
        _
      %p2113 = scmp.le.s32.totalorder 2, %s25
      // Predicated region
      $region89: #{trajectory_gat_forward.1} parent=5 // pred_check
        %p2114 = pneg %p2113
      $region90: #{trajectory_gat_forward.1} parent=5 // pred_check_branch
        %2116 = sbr.rel (%p2114) target = $region92
      $region91: #{trajectory_gat_forward.1} parent=5 // pred_region
        %s2117 = ssub.s32 %s25, 2
        // Predicated region
        $region93: #{trajectory_gat_forward.1} parent=91 // pred_check
          %p2118 = pneg %p242
        $region94: #{trajectory_gat_forward.1} parent=91 // pred_check_branch
          %2120 = sbr.rel (%p2118) target = $region96
        $region95: #{trajectory_gat_forward.1} parent=91 // pred_region
          %p2121 = scmp.lt.s32.totalorder %s31, 3
          %s2122 = scalar_select %p2121, %s31, 3
          %s2123 = smul.addr %s2122, 8
          %s2124 = scalar_lea.vmem %s8, %s2123
        $region96: #{trajectory_gat_forward.1} parent=91 // pred_fallthru
          _
      $region92: #{trajectory_gat_forward.1} parent=5 // pred_fallthru
        _
    $region6: #{trajectory_gat_forward.1} parent=1 // loop_footer
      %s29 = sadd.s32 1, %s25
    $region7: #{trajectory_gat_forward.1} parent=1 // loop_footer_branch
      %24 = sbr.rel target = $region3
    $region8: #{trajectory_gat_forward.1} parent=1 // loop_exit
      _
    %2125 = vsyncpa [#allocation3], 1
    %s2126 = scalar_lea.sflag [#allocation3], 1
    %2127 = vsyncpa %s2126, 1
    %2128 = vsyncpa [#allocation5], 1
    %s2129 = scalar_lea.sflag [#allocation5], 1
    %2130 = vsyncpa %s2129, 1
    %2131 = vsyncpa [#allocation8], 1
    %s2132 = scalar_lea.sflag [#allocation8], 1
    %2133 = vsyncpa %s2132, 1
    %2134 = vsyncpa [#allocation11], 1
    %2135 = vsyncpa [#allocation14], 1

</llo_original>
